<compile_context>
chip_gen: v7x
topology: tpu7x:2x2x1
jax: 0.10.0
libtpu: 0.0.40
codegen_flags: <defaults>
</compile_context>

<pallas_src>
import jax
import jax.numpy as jnp
from jax.experimental import pallas as pl
from jax.experimental.pallas import tpu as pltpu


def _round_up(n, m):
    return ((n + m - 1) // m) * m


def _encoder_kernel(x_ref,
                    w1_ref, b1_ref,
                    w2x_ref, w2a_ref, b2_ref,
                    w3x_ref, w3a_ref, w3b_ref, b3_ref,
                    w4x_ref, w4a_ref, w4b_ref, w4c_ref, b4_ref,
                    w5x_ref, w5a_ref, w5b_ref, w5c_ref, w5d_ref, b5_ref,
                    stack12_ref, uniform_ref):
    """One lane-dense column block: 15 tiny MXU matmuls, no lane-axis concats."""
    f32 = jnp.float32
    xb = x_ref[...]                                            # (F, TN), f32

    l11 = jnp.dot(w1_ref[...], xb, preferred_element_type=f32) + b1_ref[...]

    l12 = (jnp.dot(w2x_ref[...], xb, preferred_element_type=f32)
           + jnp.dot(w2a_ref[...], l11, preferred_element_type=f32)
           + b2_ref[...])

    l13 = (jnp.dot(w3x_ref[...], xb, preferred_element_type=f32)
           + jnp.dot(w3a_ref[...], l11, preferred_element_type=f32)
           + jnp.dot(w3b_ref[...], l12, preferred_element_type=f32)
           + b3_ref[...])

    l14 = (jnp.dot(w4x_ref[...], xb, preferred_element_type=f32)
           + jnp.dot(w4a_ref[...], l11, preferred_element_type=f32)
           + jnp.dot(w4b_ref[...], l12, preferred_element_type=f32)
           + jnp.dot(w4c_ref[...], l13, preferred_element_type=f32)
           + b4_ref[...])

    uni = (jnp.dot(w5x_ref[...], xb, preferred_element_type=f32)
           + jnp.dot(w5a_ref[...], l11, preferred_element_type=f32)
           + jnp.dot(w5b_ref[...], l12, preferred_element_type=f32)
           + jnp.dot(w5c_ref[...], l13, preferred_element_type=f32)
           + jnp.dot(w5d_ref[...], l14, preferred_element_type=f32)
           + b5_ref[...])

    F = x_ref.shape[0]
    d11 = l11.shape[0]
    d12 = l12.shape[0]
    # stack_layer_12 = cat(x, l11, l12): write the pieces straight into
    # sublane sub-ranges of the output block (no materialized concat).
    stack12_ref[0:F, :] = xb
    stack12_ref[F:F + d11, :] = l11
    stack12_ref[F + d11:F + d11 + d12, :] = l12
    uniform_ref[...] = uni


def encoder_uniform_msi(x, params, *, block_cols=1024):
    """Pallas forward pass.

    x: (N, F) array. params: list of (W, b) with W as (in, out), b as (1, out)
    (i.e. nn.Linear weights pre-transposed). Returns (stack12 (N, F+d11+d12),
    uniform (N, num)), both float32 — identical semantics to the PyTorch module.
    """
    (w1, b1), (w2, b2), (w3, b3), (w4, b4), (w5, b5) = params
    N, F = x.shape
    d11, d12, d13, d14, num = (w1.shape[1], w2.shape[1], w3.shape[1],
                               w4.shape[1], w5.shape[1])
    d_s11 = F + d11
    d_s12 = d_s11 + d12
    d_s13 = d_s12 + d13

    # (out, in) weights, split along the input axis -> no concats in-kernel.
    w1t, w2t, w3t, w4t, w5t = w1.T, w2.T, w3.T, w4.T, w5.T
    w2x, w2a = w2t[:, :F], w2t[:, F:d_s11]
    w3x, w3a, w3b = w3t[:, :F], w3t[:, F:d_s11], w3t[:, d_s11:d_s12]
    w4x, w4a, w4b, w4c = (w4t[:, :F], w4t[:, F:d_s11],
                          w4t[:, d_s11:d_s12], w4t[:, d_s12:d_s13])
    w5x, w5a, w5b, w5c, w5d = (w5t[:, :F], w5t[:, F:d_s11],
                               w5t[:, d_s11:d_s12], w5t[:, d_s12:d_s13],
                               w5t[:, d_s13:])
    b1t, b2t, b3t, b4t, b5t = b1.T, b2.T, b3.T, b4.T, b5.T       # (dout, 1)

    # Lane-dense layout: batch on lanes.  Tile the lane axis; pad to the tile.
    tn = max(128, _round_up(min(block_cols, N), 128))
    n_pad = _round_up(N, tn)
    xt = x.astype(jnp.float32).T                                  # (F, N)
    if n_pad != N:
        xt = jnp.pad(xt, ((0, 0), (0, n_pad - N)))
    grid = (n_pad // tn,)

    def col_spec(rows):
        return pl.BlockSpec((rows, tn), lambda i: (0, i))

    def full_spec(arr):
        # small parameter, resident in VMEM for every grid step (constant index_map)
        return pl.BlockSpec(arr.shape, lambda i: (0,) * arr.ndim)

    param_ops = (w1t, b1t,
                 w2x, w2a, b2t,
                 w3x, w3a, w3b, b3t,
                 w4x, w4a, w4b, w4c, b4t,
                 w5x, w5a, w5b, w5c, w5d, b5t)

    in_specs = [col_spec(F)] + [full_spec(p) for p in param_ops]
    out_specs = [col_spec(d_s12), col_spec(num)]
    out_shape = (
        jax.ShapeDtypeStruct((d_s12, n_pad), jnp.float32),
        jax.ShapeDtypeStruct((num, n_pad), jnp.float32),
    )

    s12_t, uni_t = pl.pallas_call(
        _encoder_kernel,
        out_shape=out_shape,
        grid_spec=pltpu.PrefetchScalarGridSpec(
            num_scalar_prefetch=0,
            grid=grid,
            in_specs=in_specs,
            out_specs=out_specs,
        ),
        compiler_params=pltpu.CompilerParams(
            dimension_semantics=("parallel",)),
    )(xt, *param_ops)

    # Back to the module's (N, feature) convention; drop padded columns.
    return s12_t[:, :N].T, uni_t[:, :N].T


def init_params(key, dimHR_last, nLRlevel, num):
    """Deterministic synthetic parameters.  W as (in, out); b as (1, out)."""
    in_dims = [
        dimHR_last,
        dimHR_last + nLRlevel[0],
        dimHR_last + nLRlevel[1] + nLRlevel[0],
        dimHR_last + nLRlevel[2] + nLRlevel[1] + nLRlevel[0],
        dimHR_last + nLRlevel[3] + nLRlevel[2] + nLRlevel[1] + nLRlevel[0],
    ]
    out_dims = [nLRlevel[0], nLRlevel[1], nLRlevel[2], nLRlevel[3], num]

    params = []
    for din, dout in zip(in_dims, out_dims):
        key, kw, kb = jax.random.split(key, 3)
        bound = 1.0 / jnp.sqrt(din)  # matches nn.Linear's uniform init bound
        w = jax.random.uniform(kw, (din, dout), jnp.float32, -bound, bound)
        b = jax.random.uniform(kb, (1, dout), jnp.float32, -bound, bound)
        params.append((w, b))
    return params


def reference_forward(x, params):
    """Pure-JAX reference of the PyTorch forward (for correctness checks)."""
    (w1, b1), (w2, b2), (w3, b3), (w4, b4), (w5, b5) = params
    x = x.astype(jnp.float32)
    l11 = x @ w1 + b1
    s11 = jnp.concatenate([x, l11], axis=1)
    l12 = s11 @ w2 + b2
    s12 = jnp.concatenate([s11, l12], axis=1)
    l13 = s12 @ w3 + b3
    s13 = jnp.concatenate([s12, l13], axis=1)
    l14 = s13 @ w4 + b4
    s14 = jnp.concatenate([s13, l14], axis=1)
    uniform = s14 @ w5 + b5
    return s12, uniform


if __name__ == "__main__":
    # Module-consistent small shapes: dimHR[-1]=8 spectral bands, 4 LR levels,
    # num=5 endmembers; N = 300 flattened pixels (non-multiple of the tile to
    # exercise the padded-tail path and a multi-step grid).
    dimHR = (16, 16, 8)           # only dimHR[-1] is used by the module
    nLRlevel = (4, 6, 8, 10)
    num = 5
    N = 300

    key = jax.random.PRNGKey(0)
    key, kx = jax.random.split(key)
    x = jax.random.normal(kx, (N, dimHR[-1]), jnp.float32)

    params = init_params(key, dimHR[-1], nLRlevel, num)

    # Small tile for the demo so grid > 1; for production sweep 512-2048.
    stack12, uniform = encoder_uniform_msi(x, params, block_cols=128)
    jax.block_until_ready((stack12, uniform))

    # Correctness check against pure-JAX reference.
    ref_s12, ref_u = reference_forward(x, params)
    assert stack12.shape == ref_s12.shape and uniform.shape == ref_u.shape
    assert jnp.allclose(stack12, ref_s12, atol=1e-5, rtol=1e-5)
    assert jnp.allclose(uniform, ref_u, atol=1e-5, rtol=1e-5)

    print("KERNEL_OK")
</pallas_src>

<mosaic_0001>
module attributes {stable_mosaic.version = 11 : i64} {
  func.func @_encoder_kernel(%arg0: i32, %arg1: memref<8x128xf32, #tpu.memory_space<vmem>>, %arg2: memref<4x8xf32, #tpu.memory_space<vmem>>, %arg3: memref<4x1xf32, #tpu.memory_space<vmem>>, %arg4: memref<6x8xf32, #tpu.memory_space<vmem>>, %arg5: memref<6x4xf32, #tpu.memory_space<vmem>>, %arg6: memref<6x1xf32, #tpu.memory_space<vmem>>, %arg7: memref<8x8xf32, #tpu.memory_space<vmem>>, %arg8: memref<8x4xf32, #tpu.memory_space<vmem>>, %arg9: memref<8x6xf32, #tpu.memory_space<vmem>>, %arg10: memref<8x1xf32, #tpu.memory_space<vmem>>, %arg11: memref<10x8xf32, #tpu.memory_space<vmem>>, %arg12: memref<10x4xf32, #tpu.memory_space<vmem>>, %arg13: memref<10x6xf32, #tpu.memory_space<vmem>>, %arg14: memref<10x8xf32, #tpu.memory_space<vmem>>, %arg15: memref<10x1xf32, #tpu.memory_space<vmem>>, %arg16: memref<5x8xf32, #tpu.memory_space<vmem>>, %arg17: memref<5x4xf32, #tpu.memory_space<vmem>>, %arg18: memref<5x6xf32, #tpu.memory_space<vmem>>, %arg19: memref<5x8xf32, #tpu.memory_space<vmem>>, %arg20: memref<5x10xf32, #tpu.memory_space<vmem>>, %arg21: memref<5x1xf32, #tpu.memory_space<vmem>>, %arg22: memref<18x128xf32, #tpu.memory_space<vmem>>, %arg23: memref<5x128xf32, #tpu.memory_space<vmem>>) attributes {dimension_semantics = [#tpu.dimension_semantics<parallel>], iteration_bounds = array<i64: 3>, scalar_prefetch = 0 : i64, scratch_operands = 0 : i64, tpu.core_type = #tpu.core_type<tc>, window_params = [{transform_indices = @transform_0, window_bounds = array<i64: 8, 128>}, {pipeline_mode = #tpu.pipeline_mode<synchronous>, transform_indices = @transform_1, window_bounds = array<i64: 4, 8>}, {pipeline_mode = #tpu.pipeline_mode<synchronous>, transform_indices = @transform_2, window_bounds = array<i64: 4, 1>}, {pipeline_mode = #tpu.pipeline_mode<synchronous>, transform_indices = @transform_3, window_bounds = array<i64: 6, 8>}, {pipeline_mode = #tpu.pipeline_mode<synchronous>, transform_indices = @transform_4, window_bounds = array<i64: 6, 4>}, {pipeline_mode = #tpu.pipeline_mode<synchronous>, transform_indices = @transform_5, window_bounds = array<i64: 6, 1>}, {pipeline_mode = #tpu.pipeline_mode<synchronous>, transform_indices = @transform_6, window_bounds = array<i64: 8, 8>}, {pipeline_mode = #tpu.pipeline_mode<synchronous>, transform_indices = @transform_7, window_bounds = array<i64: 8, 4>}, {pipeline_mode = #tpu.pipeline_mode<synchronous>, transform_indices = @transform_8, window_bounds = array<i64: 8, 6>}, {pipeline_mode = #tpu.pipeline_mode<synchronous>, transform_indices = @transform_9, window_bounds = array<i64: 8, 1>}, {pipeline_mode = #tpu.pipeline_mode<synchronous>, transform_indices = @transform_10, window_bounds = array<i64: 10, 8>}, {pipeline_mode = #tpu.pipeline_mode<synchronous>, transform_indices = @transform_11, window_bounds = array<i64: 10, 4>}, {pipeline_mode = #tpu.pipeline_mode<synchronous>, transform_indices = @transform_12, window_bounds = array<i64: 10, 6>}, {pipeline_mode = #tpu.pipeline_mode<synchronous>, transform_indices = @transform_13, window_bounds = array<i64: 10, 8>}, {pipeline_mode = #tpu.pipeline_mode<synchronous>, transform_indices = @transform_14, window_bounds = array<i64: 10, 1>}, {pipeline_mode = #tpu.pipeline_mode<synchronous>, transform_indices = @transform_15, window_bounds = array<i64: 5, 8>}, {pipeline_mode = #tpu.pipeline_mode<synchronous>, transform_indices = @transform_16, window_bounds = array<i64: 5, 4>}, {pipeline_mode = #tpu.pipeline_mode<synchronous>, transform_indices = @transform_17, window_bounds = array<i64: 5, 6>}, {pipeline_mode = #tpu.pipeline_mode<synchronous>, transform_indices = @transform_18, window_bounds = array<i64: 5, 8>}, {pipeline_mode = #tpu.pipeline_mode<synchronous>, transform_indices = @transform_19, window_bounds = array<i64: 5, 10>}, {pipeline_mode = #tpu.pipeline_mode<synchronous>, transform_indices = @transform_20, window_bounds = array<i64: 5, 1>}, {transform_indices = @transform_21, window_bounds = array<i64: 18, 128>}, {transform_indices = @transform_22, window_bounds = array<i64: 5, 128>}]} {
    %c0 = arith.constant 0 : index
    %c0_0 = arith.constant 0 : index
    %0 = vector.load %arg1[%c0, %c0_0] : memref<8x128xf32, #tpu.memory_space<vmem>>, vector<8x128xf32>
    %c0_1 = arith.constant 0 : index
    %c0_2 = arith.constant 0 : index
    %1 = vector.load %arg2[%c0_1, %c0_2] : memref<4x8xf32, #tpu.memory_space<vmem>>, vector<4x8xf32>
    %cst = arith.constant dense<0.000000e+00> : vector<4x128xf32>
    %2 = tpu.matmul %1, %0, %cst {dimension_numbers = #tpu.dot_dimension_numbers<[1], [0], [0], [1], [0, 0, 1, 1], [], []>} : vector<4x8xf32>, vector<8x128xf32>, vector<4x128xf32> -> vector<4x128xf32>
    %c0_3 = arith.constant 0 : index
    %c0_4 = arith.constant 0 : index
    %3 = vector.load %arg3[%c0_3, %c0_4] : memref<4x1xf32, #tpu.memory_space<vmem>>, vector<4x1xf32>
    %4 = vector.broadcast %3 : vector<4x1xf32> to vector<4x128xf32>
    %5 = arith.addf %2, %4 : vector<4x128xf32>
    %c0_5 = arith.constant 0 : index
    %c0_6 = arith.constant 0 : index
    %6 = vector.load %arg4[%c0_5, %c0_6] : memref<6x8xf32, #tpu.memory_space<vmem>>, vector<6x8xf32>
    %cst_7 = arith.constant dense<0.000000e+00> : vector<6x128xf32>
    %7 = tpu.matmul %6, %0, %cst_7 {dimension_numbers = #tpu.dot_dimension_numbers<[1], [0], [0], [1], [0, 0, 1, 1], [], []>} : vector<6x8xf32>, vector<8x128xf32>, vector<6x128xf32> -> vector<6x128xf32>
    %c0_8 = arith.constant 0 : index
    %c0_9 = arith.constant 0 : index
    %8 = vector.load %arg5[%c0_8, %c0_9] : memref<6x4xf32, #tpu.memory_space<vmem>>, vector<6x4xf32>
    %cst_10 = arith.constant dense<0.000000e+00> : vector<6x128xf32>
    %9 = tpu.matmul %8, %5, %cst_10 {dimension_numbers = #tpu.dot_dimension_numbers<[1], [0], [0], [1], [0, 0, 1, 1], [], []>} : vector<6x4xf32>, vector<4x128xf32>, vector<6x128xf32> -> vector<6x128xf32>
    %10 = arith.addf %7, %9 : vector<6x128xf32>
    %c0_11 = arith.constant 0 : index
    %c0_12 = arith.constant 0 : index
    %11 = vector.load %arg6[%c0_11, %c0_12] : memref<6x1xf32, #tpu.memory_space<vmem>>, vector<6x1xf32>
    %12 = vector.broadcast %11 : vector<6x1xf32> to vector<6x128xf32>
    %13 = arith.addf %10, %12 : vector<6x128xf32>
    %c0_13 = arith.constant 0 : index
    %c0_14 = arith.constant 0 : index
    %14 = vector.load %arg7[%c0_13, %c0_14] : memref<8x8xf32, #tpu.memory_space<vmem>>, vector<8x8xf32>
    %cst_15 = arith.constant dense<0.000000e+00> : vector<8x128xf32>
    %15 = tpu.matmul %14, %0, %cst_15 {dimension_numbers = #tpu.dot_dimension_numbers<[1], [0], [0], [1], [0, 0, 1, 1], [], []>} : vector<8x8xf32>, vector<8x128xf32>, vector<8x128xf32> -> vector<8x128xf32>
    %c0_16 = arith.constant 0 : index
    %c0_17 = arith.constant 0 : index
    %16 = vector.load %arg8[%c0_16, %c0_17] : memref<8x4xf32, #tpu.memory_space<vmem>>, vector<8x4xf32>
    %cst_18 = arith.constant dense<0.000000e+00> : vector<8x128xf32>
    %17 = tpu.matmul %16, %5, %cst_18 {dimension_numbers = #tpu.dot_dimension_numbers<[1], [0], [0], [1], [0, 0, 1, 1], [], []>} : vector<8x4xf32>, vector<4x128xf32>, vector<8x128xf32> -> vector<8x128xf32>
    %18 = arith.addf %15, %17 : vector<8x128xf32>
    %c0_19 = arith.constant 0 : index
    %c0_20 = arith.constant 0 : index
    %19 = vector.load %arg9[%c0_19, %c0_20] : memref<8x6xf32, #tpu.memory_space<vmem>>, vector<8x6xf32>
    %cst_21 = arith.constant dense<0.000000e+00> : vector<8x128xf32>
    %20 = tpu.matmul %19, %13, %cst_21 {dimension_numbers = #tpu.dot_dimension_numbers<[1], [0], [0], [1], [0, 0, 1, 1], [], []>} : vector<8x6xf32>, vector<6x128xf32>, vector<8x128xf32> -> vector<8x128xf32>
    %21 = arith.addf %18, %20 : vector<8x128xf32>
    %c0_22 = arith.constant 0 : index
    %c0_23 = arith.constant 0 : index
    %22 = vector.load %arg10[%c0_22, %c0_23] : memref<8x1xf32, #tpu.memory_space<vmem>>, vector<8x1xf32>
    %23 = vector.broadcast %22 : vector<8x1xf32> to vector<8x128xf32>
    %24 = arith.addf %21, %23 : vector<8x128xf32>
    %c0_24 = arith.constant 0 : index
    %c0_25 = arith.constant 0 : index
    %25 = vector.load %arg11[%c0_24, %c0_25] : memref<10x8xf32, #tpu.memory_space<vmem>>, vector<10x8xf32>
    %cst_26 = arith.constant dense<0.000000e+00> : vector<10x128xf32>
    %26 = tpu.matmul %25, %0, %cst_26 {dimension_numbers = #tpu.dot_dimension_numbers<[1], [0], [0], [1], [0, 0, 1, 1], [], []>} : vector<10x8xf32>, vector<8x128xf32>, vector<10x128xf32> -> vector<10x128xf32>
    %c0_27 = arith.constant 0 : index
    %c0_28 = arith.constant 0 : index
    %27 = vector.load %arg12[%c0_27, %c0_28] : memref<10x4xf32, #tpu.memory_space<vmem>>, vector<10x4xf32>
    %cst_29 = arith.constant dense<0.000000e+00> : vector<10x128xf32>
    %28 = tpu.matmul %27, %5, %cst_29 {dimension_numbers = #tpu.dot_dimension_numbers<[1], [0], [0], [1], [0, 0, 1, 1], [], []>} : vector<10x4xf32>, vector<4x128xf32>, vector<10x128xf32> -> vector<10x128xf32>
    %29 = arith.addf %26, %28 : vector<10x128xf32>
    %c0_30 = arith.constant 0 : index
    %c0_31 = arith.constant 0 : index
    %30 = vector.load %arg13[%c0_30, %c0_31] : memref<10x6xf32, #tpu.memory_space<vmem>>, vector<10x6xf32>
    %cst_32 = arith.constant dense<0.000000e+00> : vector<10x128xf32>
    %31 = tpu.matmul %30, %13, %cst_32 {dimension_numbers = #tpu.dot_dimension_numbers<[1], [0], [0], [1], [0, 0, 1, 1], [], []>} : vector<10x6xf32>, vector<6x128xf32>, vector<10x128xf32> -> vector<10x128xf32>
    %32 = arith.addf %29, %31 : vector<10x128xf32>
    %c0_33 = arith.constant 0 : index
    %c0_34 = arith.constant 0 : index
    %33 = vector.load %arg14[%c0_33, %c0_34] : memref<10x8xf32, #tpu.memory_space<vmem>>, vector<10x8xf32>
    %cst_35 = arith.constant dense<0.000000e+00> : vector<10x128xf32>
    %34 = tpu.matmul %33, %24, %cst_35 {dimension_numbers = #tpu.dot_dimension_numbers<[1], [0], [0], [1], [0, 0, 1, 1], [], []>} : vector<10x8xf32>, vector<8x128xf32>, vector<10x128xf32> -> vector<10x128xf32>
    %35 = arith.addf %32, %34 : vector<10x128xf32>
    %c0_36 = arith.constant 0 : index
    %c0_37 = arith.constant 0 : index
    %36 = vector.load %arg15[%c0_36, %c0_37] : memref<10x1xf32, #tpu.memory_space<vmem>>, vector<10x1xf32>
    %37 = vector.broadcast %36 : vector<10x1xf32> to vector<10x128xf32>
    %38 = arith.addf %35, %37 : vector<10x128xf32>
    %c0_38 = arith.constant 0 : index
    %c0_39 = arith.constant 0 : index
    %39 = vector.load %arg16[%c0_38, %c0_39] : memref<5x8xf32, #tpu.memory_space<vmem>>, vector<5x8xf32>
    %cst_40 = arith.constant dense<0.000000e+00> : vector<5x128xf32>
    %40 = tpu.matmul %39, %0, %cst_40 {dimension_numbers = #tpu.dot_dimension_numbers<[1], [0], [0], [1], [0, 0, 1, 1], [], []>} : vector<5x8xf32>, vector<8x128xf32>, vector<5x128xf32> -> vector<5x128xf32>
    %c0_41 = arith.constant 0 : index
    %c0_42 = arith.constant 0 : index
    %41 = vector.load %arg17[%c0_41, %c0_42] : memref<5x4xf32, #tpu.memory_space<vmem>>, vector<5x4xf32>
    %cst_43 = arith.constant dense<0.000000e+00> : vector<5x128xf32>
    %42 = tpu.matmul %41, %5, %cst_43 {dimension_numbers = #tpu.dot_dimension_numbers<[1], [0], [0], [1], [0, 0, 1, 1], [], []>} : vector<5x4xf32>, vector<4x128xf32>, vector<5x128xf32> -> vector<5x128xf32>
    %43 = arith.addf %40, %42 : vector<5x128xf32>
    %c0_44 = arith.constant 0 : index
    %c0_45 = arith.constant 0 : index
    %44 = vector.load %arg18[%c0_44, %c0_45] : memref<5x6xf32, #tpu.memory_space<vmem>>, vector<5x6xf32>
    %cst_46 = arith.constant dense<0.000000e+00> : vector<5x128xf32>
    %45 = tpu.matmul %44, %13, %cst_46 {dimension_numbers = #tpu.dot_dimension_numbers<[1], [0], [0], [1], [0, 0, 1, 1], [], []>} : vector<5x6xf32>, vector<6x128xf32>, vector<5x128xf32> -> vector<5x128xf32>
    %46 = arith.addf %43, %45 : vector<5x128xf32>
    %c0_47 = arith.constant 0 : index
    %c0_48 = arith.constant 0 : index
    %47 = vector.load %arg19[%c0_47, %c0_48] : memref<5x8xf32, #tpu.memory_space<vmem>>, vector<5x8xf32>
    %cst_49 = arith.constant dense<0.000000e+00> : vector<5x128xf32>
    %48 = tpu.matmul %47, %24, %cst_49 {dimension_numbers = #tpu.dot_dimension_numbers<[1], [0], [0], [1], [0, 0, 1, 1], [], []>} : vector<5x8xf32>, vector<8x128xf32>, vector<5x128xf32> -> vector<5x128xf32>
    %49 = arith.addf %46, %48 : vector<5x128xf32>
    %c0_50 = arith.constant 0 : index
    %c0_51 = arith.constant 0 : index
    %50 = vector.load %arg20[%c0_50, %c0_51] : memref<5x10xf32, #tpu.memory_space<vmem>>, vector<5x10xf32>
    %cst_52 = arith.constant dense<0.000000e+00> : vector<5x128xf32>
    %51 = tpu.matmul %50, %38, %cst_52 {dimension_numbers = #tpu.dot_dimension_numbers<[1], [0], [0], [1], [0, 0, 1, 1], [], []>} : vector<5x10xf32>, vector<10x128xf32>, vector<5x128xf32> -> vector<5x128xf32>
    %52 = arith.addf %49, %51 : vector<5x128xf32>
    %c0_53 = arith.constant 0 : index
    %c0_54 = arith.constant 0 : index
    %53 = vector.load %arg21[%c0_53, %c0_54] : memref<5x1xf32, #tpu.memory_space<vmem>>, vector<5x1xf32>
    %54 = vector.broadcast %53 : vector<5x1xf32> to vector<5x128xf32>
    %55 = arith.addf %52, %54 : vector<5x128xf32>
    %c0_55 = arith.constant 0 : index
    %c0_56 = arith.constant 0 : index
    %56 = vector.load %arg22[%c0_55, %c0_56] : memref<18x128xf32, #tpu.memory_space<vmem>>, vector<8x128xf32>
    tpu.vector_store %arg22[%c0_55, %c0_56], %0 {strides = array<i32>} : memref<18x128xf32, #tpu.memory_space<vmem>>, vector<8x128xf32>,
    %c8 = arith.constant 8 : index
    %c0_57 = arith.constant 0 : index
    %57 = vector.load %arg22[%c8, %c0_57] : memref<18x128xf32, #tpu.memory_space<vmem>>, vector<4x128xf32>
    tpu.vector_store %arg22[%c8, %c0_57], %5 {strides = array<i32>} : memref<18x128xf32, #tpu.memory_space<vmem>>, vector<4x128xf32>,
    %c12 = arith.constant 12 : index
    %c0_58 = arith.constant 0 : index
    %58 = vector.load %arg22[%c12, %c0_58] : memref<18x128xf32, #tpu.memory_space<vmem>>, vector<6x128xf32>
    tpu.vector_store %arg22[%c12, %c0_58], %13 {strides = array<i32>} : memref<18x128xf32, #tpu.memory_space<vmem>>, vector<6x128xf32>,
    %c0_59 = arith.constant 0 : index
    %c0_60 = arith.constant 0 : index
    %59 = vector.load %arg23[%c0_59, %c0_60] : memref<5x128xf32, #tpu.memory_space<vmem>>, vector<5x128xf32>
    tpu.vector_store %arg23[%c0_59, %c0_60], %55 {strides = array<i32>} : memref<5x128xf32, #tpu.memory_space<vmem>>, vector<5x128xf32>,
    return
  }
  func.func @transform_0(%arg0: i32) -> (i32, i32) {
    %c0_i32 = arith.constant 0 : i32
    %c0_i32_0 = arith.constant 0 : i32
    return %c0_i32, %arg0 : i32, i32
  }
  func.func @transform_1(%arg0: i32) -> (i32, i32) {
    %c0_i32 = arith.constant 0 : i32
    %c0_i32_0 = arith.constant 0 : i32
    %c0_i32_1 = arith.constant 0 : i32
    return %c0_i32, %c0_i32_0 : i32, i32
  }
  func.func @transform_2(%arg0: i32) -> (i32, i32) {
    %c0_i32 = arith.constant 0 : i32
    %c0_i32_0 = arith.constant 0 : i32
    %c0_i32_1 = arith.constant 0 : i32
    return %c0_i32, %c0_i32_0 : i32, i32
  }
  func.func @transform_3(%arg0: i32) -> (i32, i32) {
    %c0_i32 = arith.constant 0 : i32
    %c0_i32_0 = arith.constant 0 : i32
    %c0_i32_1 = arith.constant 0 : i32
    return %c0_i32, %c0_i32_0 : i32, i32
  }
  func.func @transform_4(%arg0: i32) -> (i32, i32) {
    %c0_i32 = arith.constant 0 : i32
    %c0_i32_0 = arith.constant 0 : i32
    %c0_i32_1 = arith.constant 0 : i32
    return %c0_i32, %c0_i32_0 : i32, i32
  }
  func.func @transform_5(%arg0: i32) -> (i32, i32) {
    %c0_i32 = arith.constant 0 : i32
    %c0_i32_0 = arith.constant 0 : i32
    %c0_i32_1 = arith.constant 0 : i32
    return %c0_i32, %c0_i32_0 : i32, i32
  }
  func.func @transform_6(%arg0: i32) -> (i32, i32) {
    %c0_i32 = arith.constant 0 : i32
    %c0_i32_0 = arith.constant 0 : i32
    %c0_i32_1 = arith.constant 0 : i32
    return %c0_i32, %c0_i32_0 : i32, i32
  }
  func.func @transform_7(%arg0: i32) -> (i32, i32) {
    %c0_i32 = arith.constant 0 : i32
    %c0_i32_0 = arith.constant 0 : i32
    %c0_i32_1 = arith.constant 0 : i32
    return %c0_i32, %c0_i32_0 : i32, i32
  }
  func.func @transform_8(%arg0: i32) -> (i32, i32) {
    %c0_i32 = arith.constant 0 : i32
    %c0_i32_0 = arith.constant 0 : i32
    %c0_i32_1 = arith.constant 0 : i32
    return %c0_i32, %c0_i32_0 : i32, i32
  }
  func.func @transform_9(%arg0: i32) -> (i32, i32) {
    %c0_i32 = arith.constant 0 : i32
    %c0_i32_0 = arith.constant 0 : i32
    %c0_i32_1 = arith.constant 0 : i32
    return %c0_i32, %c0_i32_0 : i32, i32
  }
  func.func @transform_10(%arg0: i32) -> (i32, i32) {
    %c0_i32 = arith.constant 0 : i32
    %c0_i32_0 = arith.constant 0 : i32
    %c0_i32_1 = arith.constant 0 : i32
    return %c0_i32, %c0_i32_0 : i32, i32
  }
  func.func @transform_11(%arg0: i32) -> (i32, i32) {
    %c0_i32 = arith.constant 0 : i32
    %c0_i32_0 = arith.constant 0 : i32
    %c0_i32_1 = arith.constant 0 : i32
    return %c0_i32, %c0_i32_0 : i32, i32
  }
  func.func @transform_12(%arg0: i32) -> (i32, i32) {
    %c0_i32 = arith.constant 0 : i32
    %c0_i32_0 = arith.constant 0 : i32
    %c0_i32_1 = arith.constant 0 : i32
    return %c0_i32, %c0_i32_0 : i32, i32
  }
  func.func @transform_13(%arg0: i32) -> (i32, i32) {
    %c0_i32 = arith.constant 0 : i32
    %c0_i32_0 = arith.constant 0 : i32
    %c0_i32_1 = arith.constant 0 : i32
    return %c0_i32, %c0_i32_0 : i32, i32
  }
  func.func @transform_14(%arg0: i32) -> (i32, i32) {
    %c0_i32 = arith.constant 0 : i32
    %c0_i32_0 = arith.constant 0 : i32
    %c0_i32_1 = arith.constant 0 : i32
    return %c0_i32, %c0_i32_0 : i32, i32
  }
  func.func @transform_15(%arg0: i32) -> (i32, i32) {
    %c0_i32 = arith.constant 0 : i32
    %c0_i32_0 = arith.constant 0 : i32
    %c0_i32_1 = arith.constant 0 : i32
    return %c0_i32, %c0_i32_0 : i32, i32
  }
  func.func @transform_16(%arg0: i32) -> (i32, i32) {
    %c0_i32 = arith.constant 0 : i32
    %c0_i32_0 = arith.constant 0 : i32
    %c0_i32_1 = arith.constant 0 : i32
    return %c0_i32, %c0_i32_0 : i32, i32
  }
  func.func @transform_17(%arg0: i32) -> (i32, i32) {
    %c0_i32 = arith.constant 0 : i32
    %c0_i32_0 = arith.constant 0 : i32
    %c0_i32_1 = arith.constant 0 : i32
    return %c0_i32, %c0_i32_0 : i32, i32
  }
  func.func @transform_18(%arg0: i32) -> (i32, i32) {
    %c0_i32 = arith.constant 0 : i32
    %c0_i32_0 = arith.constant 0 : i32
    %c0_i32_1 = arith.constant 0 : i32
    return %c0_i32, %c0_i32_0 : i32, i32
  }
  func.func @transform_19(%arg0: i32) -> (i32, i32) {
    %c0_i32 = arith.constant 0 : i32
    %c0_i32_0 = arith.constant 0 : i32
    %c0_i32_1 = arith.constant 0 : i32
    return %c0_i32, %c0_i32_0 : i32, i32
  }
  func.func @transform_20(%arg0: i32) -> (i32, i32) {
    %c0_i32 = arith.constant 0 : i32
    %c0_i32_0 = arith.constant 0 : i32
    %c0_i32_1 = arith.constant 0 : i32
    return %c0_i32, %c0_i32_0 : i32, i32
  }
  func.func @transform_21(%arg0: i32) -> (i32, i32) {
    %c0_i32 = arith.constant 0 : i32
    %c0_i32_0 = arith.constant 0 : i32
    return %c0_i32, %arg0 : i32, i32
  }
  func.func @transform_22(%arg0: i32) -> (i32, i32) {
    %c0_i32 = arith.constant 0 : i32
    %c0_i32_0 = arith.constant 0 : i32
    return %c0_i32, %arg0 : i32, i32
  }
}

</mosaic_0001>

<llo_original>
// kernel: tpu_custom_call.1
$region0: #{tpu_custom_call.1}
  #allocation0 [shape = 'u32[]', space=smem, size = 0x4, offset = 0x4, fixed_abs, tag = 'smem constant byte address 0x4 - core index']
  #allocation1 [shape = 'u32[144,128]{1,0:T(1,128)}', space=vmem, size = 0x12000, scoped, tag = 'internal scratch']
  %s0 = inlined_call_operand.vmem [shape: f32[8,384], index: 0, kind: input, shape index: {}]
  %s1 = inlined_call_operand.vmem [shape: f32[4,8], index: 1, kind: input, shape index: {}]
  %s2 = inlined_call_operand.vmem [shape: f32[4,1], index: 2, kind: input, shape index: {}]
  %s3 = inlined_call_operand.vmem [shape: f32[6,8], index: 3, kind: input, shape index: {}]
  %s4 = inlined_call_operand.vmem [shape: f32[6,4], index: 4, kind: input, shape index: {}]
  %s5 = inlined_call_operand.vmem [shape: f32[6,1], index: 5, kind: input, shape index: {}]
  %s6 = inlined_call_operand.vmem [shape: f32[8,8], index: 6, kind: input, shape index: {}]
  %s7 = inlined_call_operand.vmem [shape: f32[8,4], index: 7, kind: input, shape index: {}]
  %s8 = inlined_call_operand.vmem [shape: f32[8,6], index: 8, kind: input, shape index: {}]
  %s9 = inlined_call_operand.vmem [shape: f32[8,1], index: 9, kind: input, shape index: {}]
  %s10 = inlined_call_operand.vmem [shape: f32[10,8], index: 10, kind: input, shape index: {}]
  %s11 = inlined_call_operand.vmem [shape: f32[10,4], index: 11, kind: input, shape index: {}]
  %s12 = inlined_call_operand.vmem [shape: f32[10,6], index: 12, kind: input, shape index: {}]
  %s13 = inlined_call_operand.vmem [shape: f32[10,8], index: 13, kind: input, shape index: {}]
  %s14 = inlined_call_operand.vmem [shape: f32[10,1], index: 14, kind: input, shape index: {}]
  %s15 = inlined_call_operand.vmem [shape: f32[5,8], index: 15, kind: input, shape index: {}]
  %s16 = inlined_call_operand.vmem [shape: f32[5,4], index: 16, kind: input, shape index: {}]
  %s17 = inlined_call_operand.vmem [shape: f32[5,6], index: 17, kind: input, shape index: {}]
  %s18 = inlined_call_operand.vmem [shape: f32[5,8], index: 18, kind: input, shape index: {}]
  %s19 = inlined_call_operand.vmem [shape: f32[5,10], index: 19, kind: input, shape index: {}]
  %s20 = inlined_call_operand.vmem [shape: f32[5,1], index: 20, kind: input, shape index: {}]
  %s21 = inlined_call_operand.hbm [shape: f32[18,384], index: 21, kind: output, shape index: {0}]
  %s22 = inlined_call_operand.hbm [shape: f32[5,384], index: 22, kind: output, shape index: {1}]
  %23 = xla_tuple %s21, %s22
  %s24 = sld [smem:[#allocation0]]
  $region125: #{tpu_custom_call.1} parent=0
    _
  %s26 = ssub.s32 1, %s24
  %s27 = scalar_select 0, %s26, %s24
  $region1: #{tpu_custom_call.1} parent=0
    #allocation2 [shape = 'u8[24576]{0}', space=vmem, size = 0x6000, scoped, tag = 'output window, operand 0']
    #allocation3 [shape = 's32[2]{0}', space=sflag, size = 0x8, scoped, tag = 'scoped memory for tpu_custom_call.1']
    #allocation4 [shape = 'u8[8192]{0}', space=vmem, size = 0x2000, scoped, tag = 'output window, operand 1']
    #allocation5 [shape = 's32[2]{0}', space=sflag, size = 0x8, scoped, tag = 'scoped memory for tpu_custom_call.1']
    %28 = vsyncpa [#allocation3], 0
    %s29 = scalar_lea.sflag [#allocation3], 1
    %30 = vsyncpa %s29, 0
    %31 = vsyncpa [#allocation5], 0
    %s32 = scalar_lea.sflag [#allocation5], 1
    %33 = vsyncpa %s32, 0
    loop: start=0, step=1, limit=5
    $region2: #{tpu_custom_call.1} parent=1 // loop_pre_header
      _
    $region3: #{tpu_custom_call.1} parent=1 // loop_header
      %s35 = sphi 0, %s39
      %p36 = scmp.ge.s32.totalorder %s35, 5
      %s45 = sphi 0, %s47
      %s48 = sphi 0, %s45
      %s49 = sphi 0, %s48
      %s65 = sphi 0, %s49
      %s69 = sphi 0, %s69
      %s71 = sphi 0, %s69
      %s72 = sphi 0, %s71
      %s86 = sphi 0, %s72
      %s90 = sphi 0, %s90
      %s92 = sphi 0, %s90
      %s93 = sphi 0, %s92
      %s107 = sphi 0, %s93
      %s111 = sphi 0, %s111
      %s113 = sphi 0, %s111
      %s114 = sphi 0, %s113
      %s128 = sphi 0, %s114
      %s132 = sphi 0, %s132
      %s134 = sphi 0, %s132
      %s135 = sphi 0, %s134
      %s149 = sphi 0, %s135
      %s153 = sphi 0, %s153
      %s155 = sphi 0, %s153
      %s156 = sphi 0, %s155
      %s170 = sphi 0, %s156
      %s174 = sphi 0, %s174
      %s176 = sphi 0, %s174
      %s177 = sphi 0, %s176
      %s191 = sphi 0, %s177
      %s195 = sphi 0, %s195
      %s197 = sphi 0, %s195
      %s198 = sphi 0, %s197
      %s212 = sphi 0, %s198
      %s216 = sphi 0, %s216
      %s218 = sphi 0, %s216
      %s219 = sphi 0, %s218
      %s233 = sphi 0, %s219
      %s237 = sphi 0, %s237
      %s239 = sphi 0, %s237
      %s240 = sphi 0, %s239
      %s254 = sphi 0, %s240
      %s258 = sphi 0, %s258
      %s260 = sphi 0, %s258
      %s261 = sphi 0, %s260
      %s275 = sphi 0, %s261
      %s279 = sphi 0, %s279
      %s281 = sphi 0, %s279
      %s282 = sphi 0, %s281
      %s296 = sphi 0, %s282
      %s300 = sphi 0, %s300
      %s302 = sphi 0, %s300
      %s303 = sphi 0, %s302
      %s317 = sphi 0, %s303
      %s321 = sphi 0, %s321
      %s323 = sphi 0, %s321
      %s324 = sphi 0, %s323
      %s338 = sphi 0, %s324
      %s342 = sphi 0, %s342
      %s344 = sphi 0, %s342
      %s345 = sphi 0, %s344
      %s359 = sphi 0, %s345
      %s363 = sphi 0, %s363
      %s365 = sphi 0, %s363
      %s366 = sphi 0, %s365
      %s380 = sphi 0, %s366
      %s384 = sphi 0, %s384
      %s386 = sphi 0, %s384
      %s387 = sphi 0, %s386
      %s401 = sphi 0, %s387
      %s405 = sphi 0, %s405
      %s407 = sphi 0, %s405
      %s408 = sphi 0, %s407
      %s422 = sphi 0, %s408
      %s426 = sphi 0, %s426
      %s428 = sphi 0, %s426
      %s429 = sphi 0, %s428
      %s443 = sphi 0, %s429
      %s447 = sphi 0, %s447
      %s449 = sphi 0, %s447
      %s450 = sphi 0, %s449
      %s464 = sphi 0, %s450
      %s468 = sphi 0, %s468
      %s470 = sphi 0, %s468
      %s471 = sphi 0, %s470
      %s485 = sphi 0, %s471
      %s491 = sphi 0, %s493
      %s494 = sphi 0, %s491
      %s495 = sphi 0, %s494
      %s511 = sphi 0, %s495
      %s517 = sphi 0, %s519
      %s520 = sphi 0, %s517
      %s521 = sphi 0, %s520
      %s537 = sphi 0, %s521
    $region4: #{tpu_custom_call.1} parent=1 // loop_header_branch
      %38 = sbr.rel (%p36) target = $region8
    $region5: #{tpu_custom_call.1} parent=1 // loop_body
      %s40 = ssub.s32 %s35, 1
      %s41 = ssub.s32 %s35, 2
      %s42 = sadd.s32 %s35, 1
      %s43 = ssub.s32 %s35, %s42
      %p44 = scmp.eq.s32.totalorder %s43, 0
      %s46 = sadd.s32 %s45, 1
      %s47 = scalar_select %p44, %s45, %s46
      %p50 = pneg %p44
      %p51 = scmp.eq.s32.totalorder %s35, 2
      %p52 = por %p50, %p51
      %p53 = scmp.ne.s32.totalorder %s45, %s48
      %p54 = scmp.eq.s32.totalorder %s35, 0
      %p55 = por %p53, %p54
      %p56 = scmp.ne.s32.totalorder %s45, %s48
      %p57 = scmp.eq.s32.totalorder %s40, 2
      %p58 = por %p56, %p57
      %p59 = scmp.ne.s32.totalorder %s48, %s49
      %p60 = scmp.eq.s32.totalorder %s40, 0
      %p61 = por %p59, %p60
      %p62 = scmp.ne.s32.totalorder %s48, %s49
      %p63 = scmp.eq.s32.totalorder %s41, 2
      %p64 = por %p62, %p63
      %p66 = scmp.ne.s32.totalorder %s49, %s65
      %p67 = scmp.eq.s32.totalorder %s41, 0
      %p68 = por %p66, %p67
      %s70 = sadd.s32 %s69, 1
      %p73 = scmp.eq.s32.totalorder %s35, 2
      %p74 = scmp.ne.s32.totalorder %s69, %s71
      %p75 = scmp.eq.s32.totalorder %s35, 0
      %p76 = por %p74, %p75
      %p77 = scmp.ne.s32.totalorder %s69, %s71
      %p78 = scmp.eq.s32.totalorder %s40, 2
      %p79 = por %p77, %p78
      %p80 = scmp.ne.s32.totalorder %s71, %s72
      %p81 = scmp.eq.s32.totalorder %s40, 0
      %p82 = por %p80, %p81
      %p83 = scmp.ne.s32.totalorder %s71, %s72
      %p84 = scmp.eq.s32.totalorder %s41, 2
      %p85 = por %p83, %p84
      %p87 = scmp.ne.s32.totalorder %s72, %s86
      %p88 = scmp.eq.s32.totalorder %s41, 0
      %p89 = por %p87, %p88
      %s91 = sadd.s32 %s90, 1
      %p94 = scmp.eq.s32.totalorder %s35, 2
      %p95 = scmp.ne.s32.totalorder %s90, %s92
      %p96 = scmp.eq.s32.totalorder %s35, 0
      %p97 = por %p95, %p96
      %p98 = scmp.ne.s32.totalorder %s90, %s92
      %p99 = scmp.eq.s32.totalorder %s40, 2
      %p100 = por %p98, %p99
      %p101 = scmp.ne.s32.totalorder %s92, %s93
      %p102 = scmp.eq.s32.totalorder %s40, 0
      %p103 = por %p101, %p102
      %p104 = scmp.ne.s32.totalorder %s92, %s93
      %p105 = scmp.eq.s32.totalorder %s41, 2
      %p106 = por %p104, %p105
      %p108 = scmp.ne.s32.totalorder %s93, %s107
      %p109 = scmp.eq.s32.totalorder %s41, 0
      %p110 = por %p108, %p109
      %s112 = sadd.s32 %s111, 1
      %p115 = scmp.eq.s32.totalorder %s35, 2
      %p116 = scmp.ne.s32.totalorder %s111, %s113
      %p117 = scmp.eq.s32.totalorder %s35, 0
      %p118 = por %p116, %p117
      %p119 = scmp.ne.s32.totalorder %s111, %s113
      %p120 = scmp.eq.s32.totalorder %s40, 2
      %p121 = por %p119, %p120
      %p122 = scmp.ne.s32.totalorder %s113, %s114
      %p123 = scmp.eq.s32.totalorder %s40, 0
      %p124 = por %p122, %p123
      %p125 = scmp.ne.s32.totalorder %s113, %s114
      %p126 = scmp.eq.s32.totalorder %s41, 2
      %p127 = por %p125, %p126
      %p129 = scmp.ne.s32.totalorder %s114, %s128
      %p130 = scmp.eq.s32.totalorder %s41, 0
      %p131 = por %p129, %p130
      %s133 = sadd.s32 %s132, 1
      %p136 = scmp.eq.s32.totalorder %s35, 2
      %p137 = scmp.ne.s32.totalorder %s132, %s134
      %p138 = scmp.eq.s32.totalorder %s35, 0
      %p139 = por %p137, %p138
      %p140 = scmp.ne.s32.totalorder %s132, %s134
      %p141 = scmp.eq.s32.totalorder %s40, 2
      %p142 = por %p140, %p141
      %p143 = scmp.ne.s32.totalorder %s134, %s135
      %p144 = scmp.eq.s32.totalorder %s40, 0
      %p145 = por %p143, %p144
      %p146 = scmp.ne.s32.totalorder %s134, %s135
      %p147 = scmp.eq.s32.totalorder %s41, 2
      %p148 = por %p146, %p147
      %p150 = scmp.ne.s32.totalorder %s135, %s149
      %p151 = scmp.eq.s32.totalorder %s41, 0
      %p152 = por %p150, %p151
      %s154 = sadd.s32 %s153, 1
      %p157 = scmp.eq.s32.totalorder %s35, 2
      %p158 = scmp.ne.s32.totalorder %s153, %s155
      %p159 = scmp.eq.s32.totalorder %s35, 0
      %p160 = por %p158, %p159
      %p161 = scmp.ne.s32.totalorder %s153, %s155
      %p162 = scmp.eq.s32.totalorder %s40, 2
      %p163 = por %p161, %p162
      %p164 = scmp.ne.s32.totalorder %s155, %s156
      %p165 = scmp.eq.s32.totalorder %s40, 0
      %p166 = por %p164, %p165
      %p167 = scmp.ne.s32.totalorder %s155, %s156
      %p168 = scmp.eq.s32.totalorder %s41, 2
      %p169 = por %p167, %p168
      %p171 = scmp.ne.s32.totalorder %s156, %s170
      %p172 = scmp.eq.s32.totalorder %s41, 0
      %p173 = por %p171, %p172
      %s175 = sadd.s32 %s174, 1
      %p178 = scmp.eq.s32.totalorder %s35, 2
      %p179 = scmp.ne.s32.totalorder %s174, %s176
      %p180 = scmp.eq.s32.totalorder %s35, 0
      %p181 = por %p179, %p180
      %p182 = scmp.ne.s32.totalorder %s174, %s176
      %p183 = scmp.eq.s32.totalorder %s40, 2
      %p184 = por %p182, %p183
      %p185 = scmp.ne.s32.totalorder %s176, %s177
      %p186 = scmp.eq.s32.totalorder %s40, 0
      %p187 = por %p185, %p186
      %p188 = scmp.ne.s32.totalorder %s176, %s177
      %p189 = scmp.eq.s32.totalorder %s41, 2
      %p190 = por %p188, %p189
      %p192 = scmp.ne.s32.totalorder %s177, %s191
      %p193 = scmp.eq.s32.totalorder %s41, 0
      %p194 = por %p192, %p193
      %s196 = sadd.s32 %s195, 1
      %p199 = scmp.eq.s32.totalorder %s35, 2
      %p200 = scmp.ne.s32.totalorder %s195, %s197
      %p201 = scmp.eq.s32.totalorder %s35, 0
      %p202 = por %p200, %p201
      %p203 = scmp.ne.s32.totalorder %s195, %s197
      %p204 = scmp.eq.s32.totalorder %s40, 2
      %p205 = por %p203, %p204
      %p206 = scmp.ne.s32.totalorder %s197, %s198
      %p207 = scmp.eq.s32.totalorder %s40, 0
      %p208 = por %p206, %p207
      %p209 = scmp.ne.s32.totalorder %s197, %s198
      %p210 = scmp.eq.s32.totalorder %s41, 2
      %p211 = por %p209, %p210
      %p213 = scmp.ne.s32.totalorder %s198, %s212
      %p214 = scmp.eq.s32.totalorder %s41, 0
      %p215 = por %p213, %p214
      %s217 = sadd.s32 %s216, 1
      %p220 = scmp.eq.s32.totalorder %s35, 2
      %p221 = scmp.ne.s32.totalorder %s216, %s218
      %p222 = scmp.eq.s32.totalorder %s35, 0
      %p223 = por %p221, %p222
      %p224 = scmp.ne.s32.totalorder %s216, %s218
      %p225 = scmp.eq.s32.totalorder %s40, 2
      %p226 = por %p224, %p225
      %p227 = scmp.ne.s32.totalorder %s218, %s219
      %p228 = scmp.eq.s32.totalorder %s40, 0
      %p229 = por %p227, %p228
      %p230 = scmp.ne.s32.totalorder %s218, %s219
      %p231 = scmp.eq.s32.totalorder %s41, 2
      %p232 = por %p230, %p231
      %p234 = scmp.ne.s32.totalorder %s219, %s233
      %p235 = scmp.eq.s32.totalorder %s41, 0
      %p236 = por %p234, %p235
      %s238 = sadd.s32 %s237, 1
      %p241 = scmp.eq.s32.totalorder %s35, 2
      %p242 = scmp.ne.s32.totalorder %s237, %s239
      %p243 = scmp.eq.s32.totalorder %s35, 0
      %p244 = por %p242, %p243
      %p245 = scmp.ne.s32.totalorder %s237, %s239
      %p246 = scmp.eq.s32.totalorder %s40, 2
      %p247 = por %p245, %p246
      %p248 = scmp.ne.s32.totalorder %s239, %s240
      %p249 = scmp.eq.s32.totalorder %s40, 0
      %p250 = por %p248, %p249
      %p251 = scmp.ne.s32.totalorder %s239, %s240
      %p252 = scmp.eq.s32.totalorder %s41, 2
      %p253 = por %p251, %p252
      %p255 = scmp.ne.s32.totalorder %s240, %s254
      %p256 = scmp.eq.s32.totalorder %s41, 0
      %p257 = por %p255, %p256
      %s259 = sadd.s32 %s258, 1
      %p262 = scmp.eq.s32.totalorder %s35, 2
      %p263 = scmp.ne.s32.totalorder %s258, %s260
      %p264 = scmp.eq.s32.totalorder %s35, 0
      %p265 = por %p263, %p264
      %p266 = scmp.ne.s32.totalorder %s258, %s260
      %p267 = scmp.eq.s32.totalorder %s40, 2
      %p268 = por %p266, %p267
      %p269 = scmp.ne.s32.totalorder %s260, %s261
      %p270 = scmp.eq.s32.totalorder %s40, 0
      %p271 = por %p269, %p270
      %p272 = scmp.ne.s32.totalorder %s260, %s261
      %p273 = scmp.eq.s32.totalorder %s41, 2
      %p274 = por %p272, %p273
      %p276 = scmp.ne.s32.totalorder %s261, %s275
      %p277 = scmp.eq.s32.totalorder %s41, 0
      %p278 = por %p276, %p277
      %s280 = sadd.s32 %s279, 1
      %p283 = scmp.eq.s32.totalorder %s35, 2
      %p284 = scmp.ne.s32.totalorder %s279, %s281
      %p285 = scmp.eq.s32.totalorder %s35, 0
      %p286 = por %p284, %p285
      %p287 = scmp.ne.s32.totalorder %s279, %s281
      %p288 = scmp.eq.s32.totalorder %s40, 2
      %p289 = por %p287, %p288
      %p290 = scmp.ne.s32.totalorder %s281, %s282
      %p291 = scmp.eq.s32.totalorder %s40, 0
      %p292 = por %p290, %p291
      %p293 = scmp.ne.s32.totalorder %s281, %s282
      %p294 = scmp.eq.s32.totalorder %s41, 2
      %p295 = por %p293, %p294
      %p297 = scmp.ne.s32.totalorder %s282, %s296
      %p298 = scmp.eq.s32.totalorder %s41, 0
      %p299 = por %p297, %p298
      %s301 = sadd.s32 %s300, 1
      %p304 = scmp.eq.s32.totalorder %s35, 2
      %p305 = scmp.ne.s32.totalorder %s300, %s302
      %p306 = scmp.eq.s32.totalorder %s35, 0
      %p307 = por %p305, %p306
      %p308 = scmp.ne.s32.totalorder %s300, %s302
      %p309 = scmp.eq.s32.totalorder %s40, 2
      %p310 = por %p308, %p309
      %p311 = scmp.ne.s32.totalorder %s302, %s303
      %p312 = scmp.eq.s32.totalorder %s40, 0
      %p313 = por %p311, %p312
      %p314 = scmp.ne.s32.totalorder %s302, %s303
      %p315 = scmp.eq.s32.totalorder %s41, 2
      %p316 = por %p314, %p315
      %p318 = scmp.ne.s32.totalorder %s303, %s317
      %p319 = scmp.eq.s32.totalorder %s41, 0
      %p320 = por %p318, %p319
      %s322 = sadd.s32 %s321, 1
      %p325 = scmp.eq.s32.totalorder %s35, 2
      %p326 = scmp.ne.s32.totalorder %s321, %s323
      %p327 = scmp.eq.s32.totalorder %s35, 0
      %p328 = por %p326, %p327
      %p329 = scmp.ne.s32.totalorder %s321, %s323
      %p330 = scmp.eq.s32.totalorder %s40, 2
      %p331 = por %p329, %p330
      %p332 = scmp.ne.s32.totalorder %s323, %s324
      %p333 = scmp.eq.s32.totalorder %s40, 0
      %p334 = por %p332, %p333
      %p335 = scmp.ne.s32.totalorder %s323, %s324
      %p336 = scmp.eq.s32.totalorder %s41, 2
      %p337 = por %p335, %p336
      %p339 = scmp.ne.s32.totalorder %s324, %s338
      %p340 = scmp.eq.s32.totalorder %s41, 0
      %p341 = por %p339, %p340
      %s343 = sadd.s32 %s342, 1
      %p346 = scmp.eq.s32.totalorder %s35, 2
      %p347 = scmp.ne.s32.totalorder %s342, %s344
      %p348 = scmp.eq.s32.totalorder %s35, 0
      %p349 = por %p347, %p348
      %p350 = scmp.ne.s32.totalorder %s342, %s344
      %p351 = scmp.eq.s32.totalorder %s40, 2
      %p352 = por %p350, %p351
      %p353 = scmp.ne.s32.totalorder %s344, %s345
      %p354 = scmp.eq.s32.totalorder %s40, 0
      %p355 = por %p353, %p354
      %p356 = scmp.ne.s32.totalorder %s344, %s345
      %p357 = scmp.eq.s32.totalorder %s41, 2
      %p358 = por %p356, %p357
      %p360 = scmp.ne.s32.totalorder %s345, %s359
      %p361 = scmp.eq.s32.totalorder %s41, 0
      %p362 = por %p360, %p361
      %s364 = sadd.s32 %s363, 1
      %p367 = scmp.eq.s32.totalorder %s35, 2
      %p368 = scmp.ne.s32.totalorder %s363, %s365
      %p369 = scmp.eq.s32.totalorder %s35, 0
      %p370 = por %p368, %p369
      %p371 = scmp.ne.s32.totalorder %s363, %s365
      %p372 = scmp.eq.s32.totalorder %s40, 2
      %p373 = por %p371, %p372
      %p374 = scmp.ne.s32.totalorder %s365, %s366
      %p375 = scmp.eq.s32.totalorder %s40, 0
      %p376 = por %p374, %p375
      %p377 = scmp.ne.s32.totalorder %s365, %s366
      %p378 = scmp.eq.s32.totalorder %s41, 2
      %p379 = por %p377, %p378
      %p381 = scmp.ne.s32.totalorder %s366, %s380
      %p382 = scmp.eq.s32.totalorder %s41, 0
      %p383 = por %p381, %p382
      %s385 = sadd.s32 %s384, 1
      %p388 = scmp.eq.s32.totalorder %s35, 2
      %p389 = scmp.ne.s32.totalorder %s384, %s386
      %p390 = scmp.eq.s32.totalorder %s35, 0
      %p391 = por %p389, %p390
      %p392 = scmp.ne.s32.totalorder %s384, %s386
      %p393 = scmp.eq.s32.totalorder %s40, 2
      %p394 = por %p392, %p393
      %p395 = scmp.ne.s32.totalorder %s386, %s387
      %p396 = scmp.eq.s32.totalorder %s40, 0
      %p397 = por %p395, %p396
      %p398 = scmp.ne.s32.totalorder %s386, %s387
      %p399 = scmp.eq.s32.totalorder %s41, 2
      %p400 = por %p398, %p399
      %p402 = scmp.ne.s32.totalorder %s387, %s401
      %p403 = scmp.eq.s32.totalorder %s41, 0
      %p404 = por %p402, %p403
      %s406 = sadd.s32 %s405, 1
      %p409 = scmp.eq.s32.totalorder %s35, 2
      %p410 = scmp.ne.s32.totalorder %s405, %s407
      %p411 = scmp.eq.s32.totalorder %s35, 0
      %p412 = por %p410, %p411
      %p413 = scmp.ne.s32.totalorder %s405, %s407
      %p414 = scmp.eq.s32.totalorder %s40, 2
      %p415 = por %p413, %p414
      %p416 = scmp.ne.s32.totalorder %s407, %s408
      %p417 = scmp.eq.s32.totalorder %s40, 0
      %p418 = por %p416, %p417
      %p419 = scmp.ne.s32.totalorder %s407, %s408
      %p420 = scmp.eq.s32.totalorder %s41, 2
      %p421 = por %p419, %p420
      %p423 = scmp.ne.s32.totalorder %s408, %s422
      %p424 = scmp.eq.s32.totalorder %s41, 0
      %p425 = por %p423, %p424
      %s427 = sadd.s32 %s426, 1
      %p430 = scmp.eq.s32.totalorder %s35, 2
      %p431 = scmp.ne.s32.totalorder %s426, %s428
      %p432 = scmp.eq.s32.totalorder %s35, 0
      %p433 = por %p431, %p432
      %p434 = scmp.ne.s32.totalorder %s426, %s428
      %p435 = scmp.eq.s32.totalorder %s40, 2
      %p436 = por %p434, %p435
      %p437 = scmp.ne.s32.totalorder %s428, %s429
      %p438 = scmp.eq.s32.totalorder %s40, 0
      %p439 = por %p437, %p438
      %p440 = scmp.ne.s32.totalorder %s428, %s429
      %p441 = scmp.eq.s32.totalorder %s41, 2
      %p442 = por %p440, %p441
      %p444 = scmp.ne.s32.totalorder %s429, %s443
      %p445 = scmp.eq.s32.totalorder %s41, 0
      %p446 = por %p444, %p445
      %s448 = sadd.s32 %s447, 1
      %p451 = scmp.eq.s32.totalorder %s35, 2
      %p452 = scmp.ne.s32.totalorder %s447, %s449
      %p453 = scmp.eq.s32.totalorder %s35, 0
      %p454 = por %p452, %p453
      %p455 = scmp.ne.s32.totalorder %s447, %s449
      %p456 = scmp.eq.s32.totalorder %s40, 2
      %p457 = por %p455, %p456
      %p458 = scmp.ne.s32.totalorder %s449, %s450
      %p459 = scmp.eq.s32.totalorder %s40, 0
      %p460 = por %p458, %p459
      %p461 = scmp.ne.s32.totalorder %s449, %s450
      %p462 = scmp.eq.s32.totalorder %s41, 2
      %p463 = por %p461, %p462
      %p465 = scmp.ne.s32.totalorder %s450, %s464
      %p466 = scmp.eq.s32.totalorder %s41, 0
      %p467 = por %p465, %p466
      %s469 = sadd.s32 %s468, 1
      %p472 = scmp.eq.s32.totalorder %s35, 2
      %p473 = scmp.ne.s32.totalorder %s468, %s470
      %p474 = scmp.eq.s32.totalorder %s35, 0
      %p475 = por %p473, %p474
      %p476 = scmp.ne.s32.totalorder %s468, %s470
      %p477 = scmp.eq.s32.totalorder %s40, 2
      %p478 = por %p476, %p477
      %p479 = scmp.ne.s32.totalorder %s470, %s471
      %p480 = scmp.eq.s32.totalorder %s40, 0
      %p481 = por %p479, %p480
      %p482 = scmp.ne.s32.totalorder %s470, %s471
      %p483 = scmp.eq.s32.totalorder %s41, 2
      %p484 = por %p482, %p483
      %p486 = scmp.ne.s32.totalorder %s471, %s485
      %p487 = scmp.eq.s32.totalorder %s41, 0
      %p488 = por %p486, %p487
      %s489 = ssub.s32 %s35, %s42
      %p490 = scmp.eq.s32.totalorder %s489, 0
      %s492 = sadd.s32 %s491, 1
      %s493 = scalar_select %p490, %s491, %s492
      %p496 = pneg %p490
      %p497 = scmp.eq.s32.totalorder %s35, 2
      %p498 = por %p496, %p497
      %p499 = scmp.ne.s32.totalorder %s491, %s494
      %p500 = scmp.eq.s32.totalorder %s35, 0
      %p501 = por %p499, %p500
      %p502 = scmp.ne.s32.totalorder %s491, %s494
      %p503 = scmp.eq.s32.totalorder %s40, 2
      %p504 = por %p502, %p503
      %p505 = scmp.ne.s32.totalorder %s494, %s495
      %p506 = scmp.eq.s32.totalorder %s40, 0
      %p507 = por %p505, %p506
      %p508 = scmp.ne.s32.totalorder %s494, %s495
      %p509 = scmp.eq.s32.totalorder %s41, 2
      %p510 = por %p508, %p509
      %p512 = scmp.ne.s32.totalorder %s495, %s511
      %p513 = scmp.eq.s32.totalorder %s41, 0
      %p514 = por %p512, %p513
      %s515 = ssub.s32 %s35, %s42
      %p516 = scmp.eq.s32.totalorder %s515, 0
      %s518 = sadd.s32 %s517, 1
      %s519 = scalar_select %p516, %s517, %s518
      %p522 = pneg %p516
      %p523 = scmp.eq.s32.totalorder %s35, 2
      %p524 = por %p522, %p523
      %p525 = scmp.ne.s32.totalorder %s517, %s520
      %p526 = scmp.eq.s32.totalorder %s35, 0
      %p527 = por %p525, %p526
      %p528 = scmp.ne.s32.totalorder %s517, %s520
      %p529 = scmp.eq.s32.totalorder %s40, 2
      %p530 = por %p528, %p529
      %p531 = scmp.ne.s32.totalorder %s520, %s521
      %p532 = scmp.eq.s32.totalorder %s40, 0
      %p533 = por %p531, %p532
      %p534 = scmp.ne.s32.totalorder %s520, %s521
      %p535 = scmp.eq.s32.totalorder %s41, 2
      %p536 = por %p534, %p535
      %p538 = scmp.ne.s32.totalorder %s521, %s537
      %p539 = scmp.eq.s32.totalorder %s41, 0
      %p540 = por %p538, %p539
      %p541 = scmp.le.s32.totalorder 1, %s35
      %p542 = scmp.lt.s32.totalorder %s35, 4
      %p543 = pnand %p541, %p542
      %p544 = pneg %p543
      // Predicated region
      $region9: #{tpu_custom_call.1} parent=5 // pred_check
        _
      $region10: #{tpu_custom_call.1} parent=5 // pred_check_branch
        %546 = sbr.rel (%p543) target = $region12
      $region11: #{tpu_custom_call.1} parent=5 // pred_region
        %s547 = ssub.s32 %s35, 1
        // Predicated region
        $region13: #{tpu_custom_call.1} parent=11 // pred_check
          %p548 = pneg %p82
        $region14: #{tpu_custom_call.1} parent=11 // pred_check_branch
          %550 = sbr.rel (%p548) target = $region16
        $region15: #{tpu_custom_call.1} parent=11 // pred_region
          _
        $region16: #{tpu_custom_call.1} parent=11 // pred_fallthru
          _
        // Predicated region
        $region17: #{tpu_custom_call.1} parent=11 // pred_check
          %p551 = pneg %p103
        $region18: #{tpu_custom_call.1} parent=11 // pred_check_branch
          %553 = sbr.rel (%p551) target = $region20
        $region19: #{tpu_custom_call.1} parent=11 // pred_region
          _
        $region20: #{tpu_custom_call.1} parent=11 // pred_fallthru
          _
        // Predicated region
        $region21: #{tpu_custom_call.1} parent=11 // pred_check
          %p554 = pneg %p124
        $region22: #{tpu_custom_call.1} parent=11 // pred_check_branch
          %556 = sbr.rel (%p554) target = $region24
        $region23: #{tpu_custom_call.1} parent=11 // pred_region
          _
        $region24: #{tpu_custom_call.1} parent=11 // pred_fallthru
          _
        // Predicated region
        $region25: #{tpu_custom_call.1} parent=11 // pred_check
          %p557 = pneg %p145
        $region26: #{tpu_custom_call.1} parent=11 // pred_check_branch
          %559 = sbr.rel (%p557) target = $region28
        $region27: #{tpu_custom_call.1} parent=11 // pred_region
          _
        $region28: #{tpu_custom_call.1} parent=11 // pred_fallthru
          _
        // Predicated region
        $region29: #{tpu_custom_call.1} parent=11 // pred_check
          %p560 = pneg %p166
        $region30: #{tpu_custom_call.1} parent=11 // pred_check_branch
          %562 = sbr.rel (%p560) target = $region32
        $region31: #{tpu_custom_call.1} parent=11 // pred_region
          _
        $region32: #{tpu_custom_call.1} parent=11 // pred_fallthru
          _
        // Predicated region
        $region33: #{tpu_custom_call.1} parent=11 // pred_check
          %p563 = pneg %p187
        $region34: #{tpu_custom_call.1} parent=11 // pred_check_branch
          %565 = sbr.rel (%p563) target = $region36
        $region35: #{tpu_custom_call.1} parent=11 // pred_region
          _
        $region36: #{tpu_custom_call.1} parent=11 // pred_fallthru
          _
        // Predicated region
        $region37: #{tpu_custom_call.1} parent=11 // pred_check
          %p566 = pneg %p208
        $region38: #{tpu_custom_call.1} parent=11 // pred_check_branch
          %568 = sbr.rel (%p566) target = $region40
        $region39: #{tpu_custom_call.1} parent=11 // pred_region
          _
        $region40: #{tpu_custom_call.1} parent=11 // pred_fallthru
          _
        // Predicated region
        $region41: #{tpu_custom_call.1} parent=11 // pred_check
          %p569 = pneg %p229
        $region42: #{tpu_custom_call.1} parent=11 // pred_check_branch
          %571 = sbr.rel (%p569) target = $region44
        $region43: #{tpu_custom_call.1} parent=11 // pred_region
          _
        $region44: #{tpu_custom_call.1} parent=11 // pred_fallthru
          _
        // Predicated region
        $region45: #{tpu_custom_call.1} parent=11 // pred_check
          %p572 = pneg %p250
        $region46: #{tpu_custom_call.1} parent=11 // pred_check_branch
          %574 = sbr.rel (%p572) target = $region48
        $region47: #{tpu_custom_call.1} parent=11 // pred_region
          _
        $region48: #{tpu_custom_call.1} parent=11 // pred_fallthru
          _
        // Predicated region
        $region49: #{tpu_custom_call.1} parent=11 // pred_check
          %p575 = pneg %p271
        $region50: #{tpu_custom_call.1} parent=11 // pred_check_branch
          %577 = sbr.rel (%p575) target = $region52
        $region51: #{tpu_custom_call.1} parent=11 // pred_region
          _
        $region52: #{tpu_custom_call.1} parent=11 // pred_fallthru
          _
        // Predicated region
        $region53: #{tpu_custom_call.1} parent=11 // pred_check
          %p578 = pneg %p292
        $region54: #{tpu_custom_call.1} parent=11 // pred_check_branch
          %580 = sbr.rel (%p578) target = $region56
        $region55: #{tpu_custom_call.1} parent=11 // pred_region
          _
        $region56: #{tpu_custom_call.1} parent=11 // pred_fallthru
          _
        // Predicated region
        $region57: #{tpu_custom_call.1} parent=11 // pred_check
          %p581 = pneg %p313
        $region58: #{tpu_custom_call.1} parent=11 // pred_check_branch
          %583 = sbr.rel (%p581) target = $region60
        $region59: #{tpu_custom_call.1} parent=11 // pred_region
          _
        $region60: #{tpu_custom_call.1} parent=11 // pred_fallthru
          _
        // Predicated region
        $region61: #{tpu_custom_call.1} parent=11 // pred_check
          %p584 = pneg %p334
        $region62: #{tpu_custom_call.1} parent=11 // pred_check_branch
          %586 = sbr.rel (%p584) target = $region64
        $region63: #{tpu_custom_call.1} parent=11 // pred_region
          _
        $region64: #{tpu_custom_call.1} parent=11 // pred_fallthru
          _
        // Predicated region
        $region65: #{tpu_custom_call.1} parent=11 // pred_check
          %p587 = pneg %p355
        $region66: #{tpu_custom_call.1} parent=11 // pred_check_branch
          %589 = sbr.rel (%p587) target = $region68
        $region67: #{tpu_custom_call.1} parent=11 // pred_region
          _
        $region68: #{tpu_custom_call.1} parent=11 // pred_fallthru
          _
        // Predicated region
        $region69: #{tpu_custom_call.1} parent=11 // pred_check
          %p590 = pneg %p376
        $region70: #{tpu_custom_call.1} parent=11 // pred_check_branch
          %592 = sbr.rel (%p590) target = $region72
        $region71: #{tpu_custom_call.1} parent=11 // pred_region
          _
        $region72: #{tpu_custom_call.1} parent=11 // pred_fallthru
          _
        // Predicated region
        $region73: #{tpu_custom_call.1} parent=11 // pred_check
          %p593 = pneg %p397
        $region74: #{tpu_custom_call.1} parent=11 // pred_check_branch
          %595 = sbr.rel (%p593) target = $region76
        $region75: #{tpu_custom_call.1} parent=11 // pred_region
          _
        $region76: #{tpu_custom_call.1} parent=11 // pred_fallthru
          _
        // Predicated region
        $region77: #{tpu_custom_call.1} parent=11 // pred_check
          %p596 = pneg %p418
        $region78: #{tpu_custom_call.1} parent=11 // pred_check_branch
          %598 = sbr.rel (%p596) target = $region80
        $region79: #{tpu_custom_call.1} parent=11 // pred_region
          _
        $region80: #{tpu_custom_call.1} parent=11 // pred_fallthru
          _
        // Predicated region
        $region81: #{tpu_custom_call.1} parent=11 // pred_check
          %p599 = pneg %p439
        $region82: #{tpu_custom_call.1} parent=11 // pred_check_branch
          %601 = sbr.rel (%p599) target = $region84
        $region83: #{tpu_custom_call.1} parent=11 // pred_region
          _
        $region84: #{tpu_custom_call.1} parent=11 // pred_fallthru
          _
        // Predicated region
        $region85: #{tpu_custom_call.1} parent=11 // pred_check
          %p602 = pneg %p460
        $region86: #{tpu_custom_call.1} parent=11 // pred_check_branch
          %604 = sbr.rel (%p602) target = $region88
        $region87: #{tpu_custom_call.1} parent=11 // pred_region
          _
        $region88: #{tpu_custom_call.1} parent=11 // pred_fallthru
          _
        // Predicated region
        $region89: #{tpu_custom_call.1} parent=11 // pred_check
          %p605 = pneg %p481
        $region90: #{tpu_custom_call.1} parent=11 // pred_check_branch
          %607 = sbr.rel (%p605) target = $region92
        $region91: #{tpu_custom_call.1} parent=11 // pred_region
          _
        $region92: #{tpu_custom_call.1} parent=11 // pred_fallthru
          _
      $region12: #{tpu_custom_call.1} parent=5 // pred_fallthru
        _
      %p608 = scmp.lt.s32.totalorder %s35, 3
      // Predicated region
      $region93: #{tpu_custom_call.1} parent=5 // pred_check
        %p609 = pneg %p608
      $region94: #{tpu_custom_call.1} parent=5 // pred_check_branch
        %611 = sbr.rel (%p609) target = $region96
      $region95: #{tpu_custom_call.1} parent=5 // pred_region
        // Predicated region
        $region97: #{tpu_custom_call.1} parent=95 // pred_check
          %p612 = pneg %p55
        $region98: #{tpu_custom_call.1} parent=95 // pred_check_branch
          %614 = sbr.rel (%p612) target = $region100
        $region99: #{tpu_custom_call.1} parent=95 // pred_region
          %p615 = scmp.lt.s32.totalorder %s35, 2
          %s616 = scalar_select %p615, %s35, 2
          %s617 = smul.addr %s616, 8
          %s618 = scalar_lea.vmem %s0, %s617
        $region100: #{tpu_custom_call.1} parent=95 // pred_fallthru
          _
      $region96: #{tpu_custom_call.1} parent=5 // pred_fallthru
        _
      %p619 = scmp.le.s32.totalorder 1, %s35
      %p620 = scmp.lt.s32.totalorder %s35, 4
      %p621 = pnand %p619, %p620
      %p622 = pneg %p621
      // Predicated region
      $region101: #{tpu_custom_call.1} parent=5 // pred_check
        _
      $region102: #{tpu_custom_call.1} parent=5 // pred_check_branch
        %624 = sbr.rel (%p621) target = $region104
      $region103: #{tpu_custom_call.1} parent=5 // pred_region
        %s625 = ssub.s32 %s35, 1
        %p626 = scmp.lt.s32.totalorder %s40, 2
        %s627 = scalar_select %p626, %s40, 2
        %s628 = smul.addr %s627, 8
        %s629 = scalar_lea.vmem %s0, %s628
        %p630 = pneg %p61
        %p631 = pneg %p58
        %p632 = pneg %p82
        %p633 = pneg %p79
        %p634 = pneg %p103
        %p635 = pneg %p100
        %p636 = pneg %p124
        %p637 = pneg %p121
        %p638 = pneg %p145
        %p639 = pneg %p142
        %p640 = pneg %p166
        %p641 = pneg %p163
        %p642 = pneg %p187
        %p643 = pneg %p184
        %p644 = pneg %p208
        %p645 = pneg %p205
        %p646 = pneg %p229
        %p647 = pneg %p226
        %p648 = pneg %p250
        %p649 = pneg %p247
        %p650 = pneg %p271
        %p651 = pneg %p268
        %p652 = pneg %p292
        %p653 = pneg %p289
        %p654 = pneg %p313
        %p655 = pneg %p310
        %p656 = pneg %p334
        %p657 = pneg %p331
        %p658 = pneg %p355
        %p659 = pneg %p352
        %p660 = pneg %p376
        %p661 = pneg %p373
        %p662 = pneg %p397
        %p663 = pneg %p394
        %p664 = pneg %p418
        %p665 = pneg %p415
        %p666 = pneg %p439
        %p667 = pneg %p436
        %p668 = pneg %p460
        %p669 = pneg %p457
        %p670 = pneg %p481
        %p671 = pneg %p478
        %p672 = pneg %p507
        %p673 = pneg %p504
        %s674 = sand.u32 %s494, 1
        %s675 = scalar_lea.sflag [#allocation3], %s674
        %s676 = sand.u32 %s494, 1
        %s677 = smul.addr %s676, 24
        %s678 = scalar_lea.vmem [#allocation2], %s677
        %p679 = pneg %p533
        %p680 = pneg %p530
        %s681 = sand.u32 %s520, 1
        %s682 = scalar_lea.sflag [#allocation5], %s681
        %s683 = sand.u32 %s520, 1
        %s684 = smul.addr %s683, 8
        %s685 = scalar_lea.vmem [#allocation4], %s684
        %p686 = scmp.lt.s32.totalorder %s40, 2
        %s687 = scalar_select %p686, %s40, 2
        %s688 = smul.addr %s687, 8
        %s689 = scalar_lea.vmem %s0, %s688
        %v690 = vld [vmem:[%s689] sm:$0xff]
        %v691 = vld [vmem:[%s1] sm:$0xf]
        %v692 = vld [vmem:[%s2] sm:$0xf]
        %694 = vset.pattern.permute.xlu0 0
        %695 = vperm.xlu0 %694, %v692
        %v696 = vpop.permute.xlu0 %695
        %vm698 = vcmask 64512
        %v700 = vsel %vm698, %v691, 0
        %702 = vmatprep.subr.mxu0 0.0
        %703 = vmatpush1.msra.mxu0 %v690
        %704 = vmatprep.subr.mxu0 0.0
        %705 = vmatpush1.msra.mxu0 0.0
        %706 = vmatprep.subr.mxu0 0.0
        %707 = vmatpush1.msra.mxu0 0.0
        %708 = vmatprep.subr.mxu0 0.0
        %709 = vmatpush1.msra.mxu0 0.0
        %710 = vmatprep.subr.mxu0 0.0
        %711 = vmatpush1.msra.mxu0 0.0
        %712 = vmatprep.subr.mxu0 0.0
        %713 = vmatpush1.msra.mxu0 0.0
        %714 = vmatprep.subr.mxu0 0.0
        %715 = vmatpush1.msra.mxu0 0.0
        %716 = vmatprep.subr.mxu0 0.0
        %717 = vmatpush1.msra.mxu0 0.0
        %718 = vmatprep.subr.mxu0 0.0
        %719 = vmatpush1.msra.mxu0 0.0
        %720 = vmatprep.subr.mxu0 0.0
        %721 = vmatpush1.msra.mxu0 0.0
        %722 = vmatprep.subr.mxu0 0.0
        %723 = vmatpush1.msra.mxu0 0.0
        %724 = vmatprep.subr.mxu0 0.0
        %725 = vmatpush1.msra.mxu0 0.0
        %726 = vmatprep.subr.mxu0 0.0
        %727 = vmatpush1.msra.mxu0 0.0
        %728 = vmatprep.subr.mxu0 0.0
        %729 = vmatpush1.msra.mxu0 0.0
        %730 = vmatprep.subr.mxu0 0.0
        %731 = vmatpush1.msra.mxu0 0.0
        %732 = vmatprep.subr.mxu0 0.0
        %733 = vmatpush1.msra.mxu0 0.0
        %734 = vmatprep.subr.mxu0 0.0
        %735 = vmatpush1.msra.mxu0 0.0
        %736 = vmatprep.subr.mxu0 0.0
        %737 = vmatpush1.msra.mxu0 0.0
        %738 = vmatprep.subr.mxu0 0.0
        %739 = vmatpush1.msra.mxu0 0.0
        %740 = vmatprep.subr.mxu0 0.0
        %741 = vmatpush1.msra.mxu0 0.0
        %742 = vmatprep.subr.mxu0 0.0
        %743 = vmatpush1.msra.mxu0 0.0
        %744 = vmatprep.subr.mxu0 0.0
        %745 = vmatpush1.msra.mxu0 0.0
        %746 = vmatprep.subr.mxu0 0.0
        %747 = vmatpush1.msra.mxu0 0.0
        %748 = vmatprep.subr.mxu0 0.0
        %749 = vmatpush1.msra.mxu0 0.0
        %750 = vmatprep.subr.mxu0 0.0
        %751 = vmatpush1.msra.mxu0 0.0
        %752 = vmatprep.subr.mxu0 0.0
        %753 = vmatpush1.msra.mxu0 0.0
        %754 = vmatprep.subr.mxu0 0.0
        %755 = vmatpush1.msra.mxu0 0.0
        %756 = vmatprep.subr.mxu0 0.0
        %757 = vmatpush1.msra.mxu0 0.0
        %758 = vmatprep.subr.mxu0 0.0
        %759 = vmatpush1.msra.mxu0 0.0
        %760 = vmatprep.subr.mxu0 0.0
        %761 = vmatpush1.msra.mxu0 0.0
        %762 = vmatprep.subr.mxu0 0.0
        %763 = vmatpush1.msra.mxu0 0.0
        %764 = vmatprep.subr.mxu0 0.0
        %765 = vmatpush1.msra.mxu0 0.0
        %766 = vmatprep.mubr.f32.mxu0 0.0
        %767 = vmatmul.mubr.f32.gmra.mrb[0].mxu0 %v700
        %v768 = vpop.f32.mrb[0].mxu0
        %v769 = vadd.f32 %v696, %v768
        %v770 = vpop.f32.mrb[0].mxu0
        %771 = vdwg.mxu0
        %v772 = vld [vmem:[%s3] sm:$0x3f]
        %v773 = vld [vmem:[%s4] sm:$0x3f]
        %vm774 = vcmask 31744
        %v776 = vsel %vm774, %v773, 0
        %vm778 = vcmask 1043456
        %v780 = vsel %vm778, %v769, 0
        %782 = vmatprep.subr.mxu0 0.0
        %783 = vmatpush1.msra.mxu0 %v780
        %784 = vmatprep.subr.mxu0 0.0
        %785 = vmatpush1.msra.mxu0 0.0
        %786 = vmatprep.subr.mxu0 0.0
        %787 = vmatpush1.msra.mxu0 0.0
        %788 = vmatprep.subr.mxu0 0.0
        %789 = vmatpush1.msra.mxu0 0.0
        %790 = vmatprep.subr.mxu0 0.0
        %791 = vmatpush1.msra.mxu0 0.0
        %792 = vmatprep.subr.mxu0 0.0
        %793 = vmatpush1.msra.mxu0 0.0
        %794 = vmatprep.subr.mxu0 0.0
        %795 = vmatpush1.msra.mxu0 0.0
        %796 = vmatprep.subr.mxu0 0.0
        %797 = vmatpush1.msra.mxu0 0.0
        %798 = vmatprep.subr.mxu0 0.0
        %799 = vmatpush1.msra.mxu0 0.0
        %800 = vmatprep.subr.mxu0 0.0
        %801 = vmatpush1.msra.mxu0 0.0
        %802 = vmatprep.subr.mxu0 0.0
        %803 = vmatpush1.msra.mxu0 0.0
        %804 = vmatprep.subr.mxu0 0.0
        %805 = vmatpush1.msra.mxu0 0.0
        %806 = vmatprep.subr.mxu0 0.0
        %807 = vmatpush1.msra.mxu0 0.0
        %808 = vmatprep.subr.mxu0 0.0
        %809 = vmatpush1.msra.mxu0 0.0
        %810 = vmatprep.subr.mxu0 0.0
        %811 = vmatpush1.msra.mxu0 0.0
        %812 = vmatprep.subr.mxu0 0.0
        %813 = vmatpush1.msra.mxu0 0.0
        %814 = vmatprep.subr.mxu0 0.0
        %815 = vmatpush1.msra.mxu0 0.0
        %816 = vmatprep.subr.mxu0 0.0
        %817 = vmatpush1.msra.mxu0 0.0
        %818 = vmatprep.subr.mxu0 0.0
        %819 = vmatpush1.msra.mxu0 0.0
        %820 = vmatprep.subr.mxu0 0.0
        %821 = vmatpush1.msra.mxu0 0.0
        %822 = vmatprep.subr.mxu0 0.0
        %823 = vmatpush1.msra.mxu0 0.0
        %824 = vmatprep.subr.mxu0 0.0
        %825 = vmatpush1.msra.mxu0 0.0
        %826 = vmatprep.subr.mxu0 0.0
        %827 = vmatpush1.msra.mxu0 0.0
        %828 = vmatprep.subr.mxu0 0.0
        %829 = vmatpush1.msra.mxu0 0.0
        %830 = vmatprep.subr.mxu0 0.0
        %831 = vmatpush1.msra.mxu0 0.0
        %832 = vmatprep.subr.mxu0 0.0
        %833 = vmatpush1.msra.mxu0 0.0
        %834 = vmatprep.subr.mxu0 0.0
        %835 = vmatpush1.msra.mxu0 0.0
        %836 = vmatprep.subr.mxu0 0.0
        %837 = vmatpush1.msra.mxu0 0.0
        %838 = vmatprep.subr.mxu0 0.0
        %839 = vmatpush1.msra.mxu0 0.0
        %840 = vmatprep.subr.mxu0 0.0
        %841 = vmatpush1.msra.mxu0 0.0
        %842 = vmatprep.subr.mxu0 0.0
        %843 = vmatpush1.msra.mxu0 0.0
        %844 = vmatprep.subr.mxu0 0.0
        %845 = vmatpush1.msra.mxu0 0.0
        %846 = vmatprep.mubr.f32.mxu0 0.0
        %847 = vmatmul.mubr.f32.gmra.mrb[0].mxu0 %v776
        %v848 = vpop.f32.mrb[0].mxu0
        %v849 = vadd.f32 0.0, %v848
        %v850 = vpop.f32.mrb[0].mxu0
        %851 = vdwg.mxu0
        %v853 = vsel %vm698, %v772, 0
        %855 = vmatprep.subr.mxu0 0.0
        %856 = vmatpush1.msra.mxu0 %v690
        %857 = vmatprep.subr.mxu0 0.0
        %858 = vmatpush1.msra.mxu0 0.0
        %859 = vmatprep.subr.mxu0 0.0
        %860 = vmatpush1.msra.mxu0 0.0
        %861 = vmatprep.subr.mxu0 0.0
        %862 = vmatpush1.msra.mxu0 0.0
        %863 = vmatprep.subr.mxu0 0.0
        %864 = vmatpush1.msra.mxu0 0.0
        %865 = vmatprep.subr.mxu0 0.0
        %866 = vmatpush1.msra.mxu0 0.0
        %867 = vmatprep.subr.mxu0 0.0
        %868 = vmatpush1.msra.mxu0 0.0
        %869 = vmatprep.subr.mxu0 0.0
        %870 = vmatpush1.msra.mxu0 0.0
        %871 = vmatprep.subr.mxu0 0.0
        %872 = vmatpush1.msra.mxu0 0.0
        %873 = vmatprep.subr.mxu0 0.0
        %874 = vmatpush1.msra.mxu0 0.0
        %875 = vmatprep.subr.mxu0 0.0
        %876 = vmatpush1.msra.mxu0 0.0
        %877 = vmatprep.subr.mxu0 0.0
        %878 = vmatpush1.msra.mxu0 0.0
        %879 = vmatprep.subr.mxu0 0.0
        %880 = vmatpush1.msra.mxu0 0.0
        %881 = vmatprep.subr.mxu0 0.0
        %882 = vmatpush1.msra.mxu0 0.0
        %883 = vmatprep.subr.mxu0 0.0
        %884 = vmatpush1.msra.mxu0 0.0
        %885 = vmatprep.subr.mxu0 0.0
        %886 = vmatpush1.msra.mxu0 0.0
        %887 = vmatprep.subr.mxu0 0.0
        %888 = vmatpush1.msra.mxu0 0.0
        %889 = vmatprep.subr.mxu0 0.0
        %890 = vmatpush1.msra.mxu0 0.0
        %891 = vmatprep.subr.mxu0 0.0
        %892 = vmatpush1.msra.mxu0 0.0
        %893 = vmatprep.subr.mxu0 0.0
        %894 = vmatpush1.msra.mxu0 0.0
        %895 = vmatprep.subr.mxu0 0.0
        %896 = vmatpush1.msra.mxu0 0.0
        %897 = vmatprep.subr.mxu0 0.0
        %898 = vmatpush1.msra.mxu0 0.0
        %899 = vmatprep.subr.mxu0 0.0
        %900 = vmatpush1.msra.mxu0 0.0
        %901 = vmatprep.subr.mxu0 0.0
        %902 = vmatpush1.msra.mxu0 0.0
        %903 = vmatprep.subr.mxu0 0.0
        %904 = vmatpush1.msra.mxu0 0.0
        %905 = vmatprep.subr.mxu0 0.0
        %906 = vmatpush1.msra.mxu0 0.0
        %907 = vmatprep.subr.mxu0 0.0
        %908 = vmatpush1.msra.mxu0 0.0
        %909 = vmatprep.subr.mxu0 0.0
        %910 = vmatpush1.msra.mxu0 0.0
        %911 = vmatprep.subr.mxu0 0.0
        %912 = vmatpush1.msra.mxu0 0.0
        %913 = vmatprep.subr.mxu0 0.0
        %914 = vmatpush1.msra.mxu0 0.0
        %915 = vmatprep.subr.mxu0 0.0
        %916 = vmatpush1.msra.mxu0 0.0
        %917 = vmatprep.subr.mxu0 0.0
        %918 = vmatpush1.msra.mxu0 0.0
        %919 = vmatprep.mubr.f32.mxu0 0.0
        %920 = vmatmul.mubr.f32.gmra.mrb[0].mxu0 %v853
        %v921 = vpop.f32.mrb[0].mxu0
        %v922 = vadd.f32 %v849, %v921
        %v923 = vpop.f32.mrb[0].mxu0
        %924 = vdwg.mxu0
        %v925 = vld [vmem:[%s5] sm:$0x3f]
        %927 = vset.pattern.permute.xlu0 0
        %928 = vperm.xlu0 %927, %v925
        %v929 = vpop.permute.xlu0 %928
        %v931 = vadd.f32 %v922, %v929
        %v932 = vld [vmem:[%s6] sm:$0xff]
        %v933 = vld [vmem:[%s7] sm:$0xff]
        %v935 = vsel %vm774, %v933, 0
        %937 = vmatprep.subr.mxu0 0.0
        %938 = vmatpush1.msra.mxu0 %v780
        %939 = vmatprep.subr.mxu0 0.0
        %940 = vmatpush1.msra.mxu0 0.0
        %941 = vmatprep.subr.mxu0 0.0
        %942 = vmatpush1.msra.mxu0 0.0
        %943 = vmatprep.subr.mxu0 0.0
        %944 = vmatpush1.msra.mxu0 0.0
        %945 = vmatprep.subr.mxu0 0.0
        %946 = vmatpush1.msra.mxu0 0.0
        %947 = vmatprep.subr.mxu0 0.0
        %948 = vmatpush1.msra.mxu0 0.0
        %949 = vmatprep.subr.mxu0 0.0
        %950 = vmatpush1.msra.mxu0 0.0
        %951 = vmatprep.subr.mxu0 0.0
        %952 = vmatpush1.msra.mxu0 0.0
        %953 = vmatprep.subr.mxu0 0.0
        %954 = vmatpush1.msra.mxu0 0.0
        %955 = vmatprep.subr.mxu0 0.0
        %956 = vmatpush1.msra.mxu0 0.0
        %957 = vmatprep.subr.mxu0 0.0
        %958 = vmatpush1.msra.mxu0 0.0
        %959 = vmatprep.subr.mxu0 0.0
        %960 = vmatpush1.msra.mxu0 0.0
        %961 = vmatprep.subr.mxu0 0.0
        %962 = vmatpush1.msra.mxu0 0.0
        %963 = vmatprep.subr.mxu0 0.0
        %964 = vmatpush1.msra.mxu0 0.0
        %965 = vmatprep.subr.mxu0 0.0
        %966 = vmatpush1.msra.mxu0 0.0
        %967 = vmatprep.subr.mxu0 0.0
        %968 = vmatpush1.msra.mxu0 0.0
        %969 = vmatprep.subr.mxu0 0.0
        %970 = vmatpush1.msra.mxu0 0.0
        %971 = vmatprep.subr.mxu0 0.0
        %972 = vmatpush1.msra.mxu0 0.0
        %973 = vmatprep.subr.mxu0 0.0
        %974 = vmatpush1.msra.mxu0 0.0
        %975 = vmatprep.subr.mxu0 0.0
        %976 = vmatpush1.msra.mxu0 0.0
        %977 = vmatprep.subr.mxu0 0.0
        %978 = vmatpush1.msra.mxu0 0.0
        %979 = vmatprep.subr.mxu0 0.0
        %980 = vmatpush1.msra.mxu0 0.0
        %981 = vmatprep.subr.mxu0 0.0
        %982 = vmatpush1.msra.mxu0 0.0
        %983 = vmatprep.subr.mxu0 0.0
        %984 = vmatpush1.msra.mxu0 0.0
        %985 = vmatprep.subr.mxu0 0.0
        %986 = vmatpush1.msra.mxu0 0.0
        %987 = vmatprep.subr.mxu0 0.0
        %988 = vmatpush1.msra.mxu0 0.0
        %989 = vmatprep.subr.mxu0 0.0
        %990 = vmatpush1.msra.mxu0 0.0
        %991 = vmatprep.subr.mxu0 0.0
        %992 = vmatpush1.msra.mxu0 0.0
        %993 = vmatprep.subr.mxu0 0.0
        %994 = vmatpush1.msra.mxu0 0.0
        %995 = vmatprep.subr.mxu0 0.0
        %996 = vmatpush1.msra.mxu0 0.0
        %997 = vmatprep.subr.mxu0 0.0
        %998 = vmatpush1.msra.mxu0 0.0
        %999 = vmatprep.subr.mxu0 0.0
        %1000 = vmatpush1.msra.mxu0 0.0
        %1001 = vmatprep.mubr.f32.mxu0 0.0
        %1002 = vmatmul.mubr.f32.gmra.mrb[0].mxu0 %v935
        %v1003 = vpop.f32.mrb[0].mxu0
        %v1004 = vadd.f32 0.0, %v1003
        %v1005 = vpop.f32.mrb[0].mxu0
        %1006 = vdwg.mxu0
        %v1008 = vsel %vm698, %v932, 0
        %1010 = vmatprep.subr.mxu0 0.0
        %1011 = vmatpush1.msra.mxu0 %v690
        %1012 = vmatprep.subr.mxu0 0.0
        %1013 = vmatpush1.msra.mxu0 0.0
        %1014 = vmatprep.subr.mxu0 0.0
        %1015 = vmatpush1.msra.mxu0 0.0
        %1016 = vmatprep.subr.mxu0 0.0
        %1017 = vmatpush1.msra.mxu0 0.0
        %1018 = vmatprep.subr.mxu0 0.0
        %1019 = vmatpush1.msra.mxu0 0.0
        %1020 = vmatprep.subr.mxu0 0.0
        %1021 = vmatpush1.msra.mxu0 0.0
        %1022 = vmatprep.subr.mxu0 0.0
        %1023 = vmatpush1.msra.mxu0 0.0
        %1024 = vmatprep.subr.mxu0 0.0
        %1025 = vmatpush1.msra.mxu0 0.0
        %1026 = vmatprep.subr.mxu0 0.0
        %1027 = vmatpush1.msra.mxu0 0.0
        %1028 = vmatprep.subr.mxu0 0.0
        %1029 = vmatpush1.msra.mxu0 0.0
        %1030 = vmatprep.subr.mxu0 0.0
        %1031 = vmatpush1.msra.mxu0 0.0
        %1032 = vmatprep.subr.mxu0 0.0
        %1033 = vmatpush1.msra.mxu0 0.0
        %1034 = vmatprep.subr.mxu0 0.0
        %1035 = vmatpush1.msra.mxu0 0.0
        %1036 = vmatprep.subr.mxu0 0.0
        %1037 = vmatpush1.msra.mxu0 0.0
        %1038 = vmatprep.subr.mxu0 0.0
        %1039 = vmatpush1.msra.mxu0 0.0
        %1040 = vmatprep.subr.mxu0 0.0
        %1041 = vmatpush1.msra.mxu0 0.0
        %1042 = vmatprep.subr.mxu0 0.0
        %1043 = vmatpush1.msra.mxu0 0.0
        %1044 = vmatprep.subr.mxu0 0.0
        %1045 = vmatpush1.msra.mxu0 0.0
        %1046 = vmatprep.subr.mxu0 0.0
        %1047 = vmatpush1.msra.mxu0 0.0
        %1048 = vmatprep.subr.mxu0 0.0
        %1049 = vmatpush1.msra.mxu0 0.0
        %1050 = vmatprep.subr.mxu0 0.0
        %1051 = vmatpush1.msra.mxu0 0.0
        %1052 = vmatprep.subr.mxu0 0.0
        %1053 = vmatpush1.msra.mxu0 0.0
        %1054 = vmatprep.subr.mxu0 0.0
        %1055 = vmatpush1.msra.mxu0 0.0
        %1056 = vmatprep.subr.mxu0 0.0
        %1057 = vmatpush1.msra.mxu0 0.0
        %1058 = vmatprep.subr.mxu0 0.0
        %1059 = vmatpush1.msra.mxu0 0.0
        %1060 = vmatprep.subr.mxu0 0.0
        %1061 = vmatpush1.msra.mxu0 0.0
        %1062 = vmatprep.subr.mxu0 0.0
        %1063 = vmatpush1.msra.mxu0 0.0
        %1064 = vmatprep.subr.mxu0 0.0
        %1065 = vmatpush1.msra.mxu0 0.0
        %1066 = vmatprep.subr.mxu0 0.0
        %1067 = vmatpush1.msra.mxu0 0.0
        %1068 = vmatprep.subr.mxu0 0.0
        %1069 = vmatpush1.msra.mxu0 0.0
        %1070 = vmatprep.subr.mxu0 0.0
        %1071 = vmatpush1.msra.mxu0 0.0
        %1072 = vmatprep.subr.mxu0 0.0
        %1073 = vmatpush1.msra.mxu0 0.0
        %1074 = vmatprep.mubr.f32.mxu0 0.0
        %1075 = vmatmul.mubr.f32.gmra.mrb[0].mxu0 %v1008
        %v1076 = vpop.f32.mrb[0].mxu0
        %v1077 = vadd.f32 %v1004, %v1076
        %v1078 = vpop.f32.mrb[0].mxu0
        %1079 = vdwg.mxu0
        %v1080 = vld [vmem:[%s8] sm:$0xff]
        %vm1081 = vcmask 48128
        %v1083 = vsel %vm1081, %v1080, 0
        %vm1085 = vcmask 1045504
        %v1087 = vsel %vm1085, %v931, 0
        %1089 = vmatprep.subr.mxu0 0.0
        %1090 = vmatpush1.msra.mxu0 %v1087
        %1091 = vmatprep.subr.mxu0 0.0
        %1092 = vmatpush1.msra.mxu0 0.0
        %1093 = vmatprep.subr.mxu0 0.0
        %1094 = vmatpush1.msra.mxu0 0.0
        %1095 = vmatprep.subr.mxu0 0.0
        %1096 = vmatpush1.msra.mxu0 0.0
        %1097 = vmatprep.subr.mxu0 0.0
        %1098 = vmatpush1.msra.mxu0 0.0
        %1099 = vmatprep.subr.mxu0 0.0
        %1100 = vmatpush1.msra.mxu0 0.0
        %1101 = vmatprep.subr.mxu0 0.0
        %1102 = vmatpush1.msra.mxu0 0.0
        %1103 = vmatprep.subr.mxu0 0.0
        %1104 = vmatpush1.msra.mxu0 0.0
        %1105 = vmatprep.subr.mxu0 0.0
        %1106 = vmatpush1.msra.mxu0 0.0
        %1107 = vmatprep.subr.mxu0 0.0
        %1108 = vmatpush1.msra.mxu0 0.0
        %1109 = vmatprep.subr.mxu0 0.0
        %1110 = vmatpush1.msra.mxu0 0.0
        %1111 = vmatprep.subr.mxu0 0.0
        %1112 = vmatpush1.msra.mxu0 0.0
        %1113 = vmatprep.subr.mxu0 0.0
        %1114 = vmatpush1.msra.mxu0 0.0
        %1115 = vmatprep.subr.mxu0 0.0
        %1116 = vmatpush1.msra.mxu0 0.0
        %1117 = vmatprep.subr.mxu0 0.0
        %1118 = vmatpush1.msra.mxu0 0.0
        %1119 = vmatprep.subr.mxu0 0.0
        %1120 = vmatpush1.msra.mxu0 0.0
        %1121 = vmatprep.subr.mxu0 0.0
        %1122 = vmatpush1.msra.mxu0 0.0
        %1123 = vmatprep.subr.mxu0 0.0
        %1124 = vmatpush1.msra.mxu0 0.0
        %1125 = vmatprep.subr.mxu0 0.0
        %1126 = vmatpush1.msra.mxu0 0.0
        %1127 = vmatprep.subr.mxu0 0.0
        %1128 = vmatpush1.msra.mxu0 0.0
        %1129 = vmatprep.subr.mxu0 0.0
        %1130 = vmatpush1.msra.mxu0 0.0
        %1131 = vmatprep.subr.mxu0 0.0
        %1132 = vmatpush1.msra.mxu0 0.0
        %1133 = vmatprep.subr.mxu0 0.0
        %1134 = vmatpush1.msra.mxu0 0.0
        %1135 = vmatprep.subr.mxu0 0.0
        %1136 = vmatpush1.msra.mxu0 0.0
        %1137 = vmatprep.subr.mxu0 0.0
        %1138 = vmatpush1.msra.mxu0 0.0
        %1139 = vmatprep.subr.mxu0 0.0
        %1140 = vmatpush1.msra.mxu0 0.0
        %1141 = vmatprep.subr.mxu0 0.0
        %1142 = vmatpush1.msra.mxu0 0.0
        %1143 = vmatprep.subr.mxu0 0.0
        %1144 = vmatpush1.msra.mxu0 0.0
        %1145 = vmatprep.subr.mxu0 0.0
        %1146 = vmatpush1.msra.mxu0 0.0
        %1147 = vmatprep.subr.mxu0 0.0
        %1148 = vmatpush1.msra.mxu0 0.0
        %1149 = vmatprep.subr.mxu0 0.0
        %1150 = vmatpush1.msra.mxu0 0.0
        %1151 = vmatprep.subr.mxu0 0.0
        %1152 = vmatpush1.msra.mxu0 0.0
        %1153 = vmatprep.mubr.f32.mxu0 0.0
        %1154 = vmatmul.mubr.f32.gmra.mrb[0].mxu0 %v1083
        %v1155 = vpop.f32.mrb[0].mxu0
        %v1156 = vadd.f32 0.0, %v1155
        %v1157 = vpop.f32.mrb[0].mxu0
        %1158 = vdwg.mxu0
        %v1159 = vadd.f32 %v1077, %v1156
        %v1160 = vld [vmem:[%s9] sm:$0xff]
        %1162 = vset.pattern.permute.xlu0 0
        %1163 = vperm.xlu0 %1162, %v1160
        %v1164 = vpop.permute.xlu0 %1163
        %v1166 = vadd.f32 %v1159, %v1164
        %v1167 = vld [vmem:[%s10] sm:$0xff]
        %v1168 = vld [vmem:[%s10 + $0x8] sm:$0x3]
        %v1169 = vld [vmem:[%s11] sm:$0xff]
        %v1170 = vld [vmem:[%s11 + $0x8] sm:$0x3]
        %v1172 = vsel %vm774, %v1169, 0
        %v1175 = vsel %vm774, %v1170, 0
        %1177 = vmatprep.subr.mxu0 0.0
        %1178 = vmatpush1.msra.mxu0 %v780
        %1179 = vmatprep.subr.mxu0 0.0
        %1180 = vmatpush1.msra.mxu0 0.0
        %1181 = vmatprep.subr.mxu0 0.0
        %1182 = vmatpush1.msra.mxu0 0.0
        %1183 = vmatprep.subr.mxu0 0.0
        %1184 = vmatpush1.msra.mxu0 0.0
        %1185 = vmatprep.subr.mxu0 0.0
        %1186 = vmatpush1.msra.mxu0 0.0
        %1187 = vmatprep.subr.mxu0 0.0
        %1188 = vmatpush1.msra.mxu0 0.0
        %1189 = vmatprep.subr.mxu0 0.0
        %1190 = vmatpush1.msra.mxu0 0.0
        %1191 = vmatprep.subr.mxu0 0.0
        %1192 = vmatpush1.msra.mxu0 0.0
        %1193 = vmatprep.subr.mxu0 0.0
        %1194 = vmatpush1.msra.mxu0 0.0
        %1195 = vmatprep.subr.mxu0 0.0
        %1196 = vmatpush1.msra.mxu0 0.0
        %1197 = vmatprep.subr.mxu0 0.0
        %1198 = vmatpush1.msra.mxu0 0.0
        %1199 = vmatprep.subr.mxu0 0.0
        %1200 = vmatpush1.msra.mxu0 0.0
        %1201 = vmatprep.subr.mxu0 0.0
        %1202 = vmatpush1.msra.mxu0 0.0
        %1203 = vmatprep.subr.mxu0 0.0
        %1204 = vmatpush1.msra.mxu0 0.0
        %1205 = vmatprep.subr.mxu0 0.0
        %1206 = vmatpush1.msra.mxu0 0.0
        %1207 = vmatprep.subr.mxu0 0.0
        %1208 = vmatpush1.msra.mxu0 0.0
        %1209 = vmatprep.subr.mxu0 0.0
        %1210 = vmatpush1.msra.mxu0 0.0
        %1211 = vmatprep.subr.mxu0 0.0
        %1212 = vmatpush1.msra.mxu0 0.0
        %1213 = vmatprep.subr.mxu0 0.0
        %1214 = vmatpush1.msra.mxu0 0.0
        %1215 = vmatprep.subr.mxu0 0.0
        %1216 = vmatpush1.msra.mxu0 0.0
        %1217 = vmatprep.subr.mxu0 0.0
        %1218 = vmatpush1.msra.mxu0 0.0
        %1219 = vmatprep.subr.mxu0 0.0
        %1220 = vmatpush1.msra.mxu0 0.0
        %1221 = vmatprep.subr.mxu0 0.0
        %1222 = vmatpush1.msra.mxu0 0.0
        %1223 = vmatprep.subr.mxu0 0.0
        %1224 = vmatpush1.msra.mxu0 0.0
        %1225 = vmatprep.subr.mxu0 0.0
        %1226 = vmatpush1.msra.mxu0 0.0
        %1227 = vmatprep.subr.mxu0 0.0
        %1228 = vmatpush1.msra.mxu0 0.0
        %1229 = vmatprep.subr.mxu0 0.0
        %1230 = vmatpush1.msra.mxu0 0.0
        %1231 = vmatprep.subr.mxu0 0.0
        %1232 = vmatpush1.msra.mxu0 0.0
        %1233 = vmatprep.subr.mxu0 0.0
        %1234 = vmatpush1.msra.mxu0 0.0
        %1235 = vmatprep.subr.mxu0 0.0
        %1236 = vmatpush1.msra.mxu0 0.0
        %1237 = vmatprep.subr.mxu0 0.0
        %1238 = vmatpush1.msra.mxu0 0.0
        %1239 = vmatprep.subr.mxu0 0.0
        %1240 = vmatpush1.msra.mxu0 0.0
        %1241 = vmatprep.mubr.f32.mxu0 0.0
        %1242 = vmatmul.mubr.f32.gmra.mrb[0].mxu0 %v1172
        %v1243 = vpop.f32.mrb[0].mxu0
        %v1244 = vadd.f32 0.0, %v1243
        %v1245 = vpop.f32.mrb[0].mxu0
        %1246 = vmatprep.mubr.f32.mxu0 0.0
        %1247 = vmatmul.mubr.f32.gmra.mrb[0].mxu0 %v1175
        %v1248 = vpop.f32.mrb[0].mxu0
        %v1249 = vadd.f32 0.0, %v1248
        %v1250 = vpop.f32.mrb[0].mxu0
        %1251 = vdwg.mxu0
        %v1253 = vsel %vm698, %v1167, 0
        %v1256 = vsel %vm698, %v1168, 0
        %1258 = vmatprep.subr.mxu0 0.0
        %1259 = vmatpush1.msra.mxu0 %v690
        %1260 = vmatprep.subr.mxu0 0.0
        %1261 = vmatpush1.msra.mxu0 0.0
        %1262 = vmatprep.subr.mxu0 0.0
        %1263 = vmatpush1.msra.mxu0 0.0
        %1264 = vmatprep.subr.mxu0 0.0
        %1265 = vmatpush1.msra.mxu0 0.0
        %1266 = vmatprep.subr.mxu0 0.0
        %1267 = vmatpush1.msra.mxu0 0.0
        %1268 = vmatprep.subr.mxu0 0.0
        %1269 = vmatpush1.msra.mxu0 0.0
        %1270 = vmatprep.subr.mxu0 0.0
        %1271 = vmatpush1.msra.mxu0 0.0
        %1272 = vmatprep.subr.mxu0 0.0
        %1273 = vmatpush1.msra.mxu0 0.0
        %1274 = vmatprep.subr.mxu0 0.0
        %1275 = vmatpush1.msra.mxu0 0.0
        %1276 = vmatprep.subr.mxu0 0.0
        %1277 = vmatpush1.msra.mxu0 0.0
        %1278 = vmatprep.subr.mxu0 0.0
        %1279 = vmatpush1.msra.mxu0 0.0
        %1280 = vmatprep.subr.mxu0 0.0
        %1281 = vmatpush1.msra.mxu0 0.0
        %1282 = vmatprep.subr.mxu0 0.0
        %1283 = vmatpush1.msra.mxu0 0.0
        %1284 = vmatprep.subr.mxu0 0.0
        %1285 = vmatpush1.msra.mxu0 0.0
        %1286 = vmatprep.subr.mxu0 0.0
        %1287 = vmatpush1.msra.mxu0 0.0
        %1288 = vmatprep.subr.mxu0 0.0
        %1289 = vmatpush1.msra.mxu0 0.0
        %1290 = vmatprep.subr.mxu0 0.0
        %1291 = vmatpush1.msra.mxu0 0.0
        %1292 = vmatprep.subr.mxu0 0.0
        %1293 = vmatpush1.msra.mxu0 0.0
        %1294 = vmatprep.subr.mxu0 0.0
        %1295 = vmatpush1.msra.mxu0 0.0
        %1296 = vmatprep.subr.mxu0 0.0
        %1297 = vmatpush1.msra.mxu0 0.0
        %1298 = vmatprep.subr.mxu0 0.0
        %1299 = vmatpush1.msra.mxu0 0.0
        %1300 = vmatprep.subr.mxu0 0.0
        %1301 = vmatpush1.msra.mxu0 0.0
        %1302 = vmatprep.subr.mxu0 0.0
        %1303 = vmatpush1.msra.mxu0 0.0
        %1304 = vmatprep.subr.mxu0 0.0
        %1305 = vmatpush1.msra.mxu0 0.0
        %1306 = vmatprep.subr.mxu0 0.0
        %1307 = vmatpush1.msra.mxu0 0.0
        %1308 = vmatprep.subr.mxu0 0.0
        %1309 = vmatpush1.msra.mxu0 0.0
        %1310 = vmatprep.subr.mxu0 0.0
        %1311 = vmatpush1.msra.mxu0 0.0
        %1312 = vmatprep.subr.mxu0 0.0
        %1313 = vmatpush1.msra.mxu0 0.0
        %1314 = vmatprep.subr.mxu0 0.0
        %1315 = vmatpush1.msra.mxu0 0.0
        %1316 = vmatprep.subr.mxu0 0.0
        %1317 = vmatpush1.msra.mxu0 0.0
        %1318 = vmatprep.subr.mxu0 0.0
        %1319 = vmatpush1.msra.mxu0 0.0
        %1320 = vmatprep.subr.mxu0 0.0
        %1321 = vmatpush1.msra.mxu0 0.0
        %1322 = vmatprep.mubr.f32.mxu0 0.0
        %1323 = vmatmul.mubr.f32.gmra.mrb[0].mxu0 %v1253
        %v1324 = vpop.f32.mrb[0].mxu0
        %v1325 = vadd.f32 %v1244, %v1324
        %v1326 = vpop.f32.mrb[0].mxu0
        %1327 = vmatprep.mubr.f32.mxu0 0.0
        %1328 = vmatmul.mubr.f32.gmra.mrb[0].mxu0 %v1256
        %v1329 = vpop.f32.mrb[0].mxu0
        %v1330 = vadd.f32 %v1249, %v1329
        %v1331 = vpop.f32.mrb[0].mxu0
        %1332 = vdwg.mxu0
        %v1333 = vld [vmem:[%s12] sm:$0xff]
        %v1334 = vld [vmem:[%s12 + $0x8] sm:$0x3]
        %v1336 = vsel %vm1081, %v1333, 0
        %v1339 = vsel %vm1081, %v1334, 0
        %1341 = vmatprep.subr.mxu0 0.0
        %1342 = vmatpush1.msra.mxu0 %v1087
        %1343 = vmatprep.subr.mxu0 0.0
        %1344 = vmatpush1.msra.mxu0 0.0
        %1345 = vmatprep.subr.mxu0 0.0
        %1346 = vmatpush1.msra.mxu0 0.0
        %1347 = vmatprep.subr.mxu0 0.0
        %1348 = vmatpush1.msra.mxu0 0.0
        %1349 = vmatprep.subr.mxu0 0.0
        %1350 = vmatpush1.msra.mxu0 0.0
        %1351 = vmatprep.subr.mxu0 0.0
        %1352 = vmatpush1.msra.mxu0 0.0
        %1353 = vmatprep.subr.mxu0 0.0
        %1354 = vmatpush1.msra.mxu0 0.0
        %1355 = vmatprep.subr.mxu0 0.0
        %1356 = vmatpush1.msra.mxu0 0.0
        %1357 = vmatprep.subr.mxu0 0.0
        %1358 = vmatpush1.msra.mxu0 0.0
        %1359 = vmatprep.subr.mxu0 0.0
        %1360 = vmatpush1.msra.mxu0 0.0
        %1361 = vmatprep.subr.mxu0 0.0
        %1362 = vmatpush1.msra.mxu0 0.0
        %1363 = vmatprep.subr.mxu0 0.0
        %1364 = vmatpush1.msra.mxu0 0.0
        %1365 = vmatprep.subr.mxu0 0.0
        %1366 = vmatpush1.msra.mxu0 0.0
        %1367 = vmatprep.subr.mxu0 0.0
        %1368 = vmatpush1.msra.mxu0 0.0
        %1369 = vmatprep.subr.mxu0 0.0
        %1370 = vmatpush1.msra.mxu0 0.0
        %1371 = vmatprep.subr.mxu0 0.0
        %1372 = vmatpush1.msra.mxu0 0.0
        %1373 = vmatprep.subr.mxu0 0.0
        %1374 = vmatpush1.msra.mxu0 0.0
        %1375 = vmatprep.subr.mxu0 0.0
        %1376 = vmatpush1.msra.mxu0 0.0
        %1377 = vmatprep.subr.mxu0 0.0
        %1378 = vmatpush1.msra.mxu0 0.0
        %1379 = vmatprep.subr.mxu0 0.0
        %1380 = vmatpush1.msra.mxu0 0.0
        %1381 = vmatprep.subr.mxu0 0.0
        %1382 = vmatpush1.msra.mxu0 0.0
        %1383 = vmatprep.subr.mxu0 0.0
        %1384 = vmatpush1.msra.mxu0 0.0
        %1385 = vmatprep.subr.mxu0 0.0
        %1386 = vmatpush1.msra.mxu0 0.0
        %1387 = vmatprep.subr.mxu0 0.0
        %1388 = vmatpush1.msra.mxu0 0.0
        %1389 = vmatprep.subr.mxu0 0.0
        %1390 = vmatpush1.msra.mxu0 0.0
        %1391 = vmatprep.subr.mxu0 0.0
        %1392 = vmatpush1.msra.mxu0 0.0
        %1393 = vmatprep.subr.mxu0 0.0
        %1394 = vmatpush1.msra.mxu0 0.0
        %1395 = vmatprep.subr.mxu0 0.0
        %1396 = vmatpush1.msra.mxu0 0.0
        %1397 = vmatprep.subr.mxu0 0.0
        %1398 = vmatpush1.msra.mxu0 0.0
        %1399 = vmatprep.subr.mxu0 0.0
        %1400 = vmatpush1.msra.mxu0 0.0
        %1401 = vmatprep.subr.mxu0 0.0
        %1402 = vmatpush1.msra.mxu0 0.0
        %1403 = vmatprep.subr.mxu0 0.0
        %1404 = vmatpush1.msra.mxu0 0.0
        %1405 = vmatprep.mubr.f32.mxu0 0.0
        %1406 = vmatmul.mubr.f32.gmra.mrb[0].mxu0 %v1336
        %v1407 = vpop.f32.mrb[0].mxu0
        %v1408 = vadd.f32 0.0, %v1407
        %v1409 = vpop.f32.mrb[0].mxu0
        %1410 = vmatprep.mubr.f32.mxu0 0.0
        %1411 = vmatmul.mubr.f32.gmra.mrb[0].mxu0 %v1339
        %v1412 = vpop.f32.mrb[0].mxu0
        %v1413 = vadd.f32 0.0, %v1412
        %v1414 = vpop.f32.mrb[0].mxu0
        %1415 = vdwg.mxu0
        %v1416 = vadd.f32 %v1325, %v1408
        %v1417 = vadd.f32 %v1330, %v1413
        %v1418 = vld [vmem:[%s13] sm:$0xff]
        %v1419 = vld [vmem:[%s13 + $0x8] sm:$0x3]
        %v1421 = vsel %vm698, %v1418, 0
        %v1424 = vsel %vm698, %v1419, 0
        %1426 = vmatprep.subr.mxu0 0.0
        %1427 = vmatpush1.msra.mxu0 %v1166
        %1428 = vmatprep.subr.mxu0 0.0
        %1429 = vmatpush1.msra.mxu0 0.0
        %1430 = vmatprep.subr.mxu0 0.0
        %1431 = vmatpush1.msra.mxu0 0.0
        %1432 = vmatprep.subr.mxu0 0.0
        %1433 = vmatpush1.msra.mxu0 0.0
        %1434 = vmatprep.subr.mxu0 0.0
        %1435 = vmatpush1.msra.mxu0 0.0
        %1436 = vmatprep.subr.mxu0 0.0
        %1437 = vmatpush1.msra.mxu0 0.0
        %1438 = vmatprep.subr.mxu0 0.0
        %1439 = vmatpush1.msra.mxu0 0.0
        %1440 = vmatprep.subr.mxu0 0.0
        %1441 = vmatpush1.msra.mxu0 0.0
        %1442 = vmatprep.subr.mxu0 0.0
        %1443 = vmatpush1.msra.mxu0 0.0
        %1444 = vmatprep.subr.mxu0 0.0
        %1445 = vmatpush1.msra.mxu0 0.0
        %1446 = vmatprep.subr.mxu0 0.0
        %1447 = vmatpush1.msra.mxu0 0.0
        %1448 = vmatprep.subr.mxu0 0.0
        %1449 = vmatpush1.msra.mxu0 0.0
        %1450 = vmatprep.subr.mxu0 0.0
        %1451 = vmatpush1.msra.mxu0 0.0
        %1452 = vmatprep.subr.mxu0 0.0
        %1453 = vmatpush1.msra.mxu0 0.0
        %1454 = vmatprep.subr.mxu0 0.0
        %1455 = vmatpush1.msra.mxu0 0.0
        %1456 = vmatprep.subr.mxu0 0.0
        %1457 = vmatpush1.msra.mxu0 0.0
        %1458 = vmatprep.subr.mxu0 0.0
        %1459 = vmatpush1.msra.mxu0 0.0
        %1460 = vmatprep.subr.mxu0 0.0
        %1461 = vmatpush1.msra.mxu0 0.0
        %1462 = vmatprep.subr.mxu0 0.0
        %1463 = vmatpush1.msra.mxu0 0.0
        %1464 = vmatprep.subr.mxu0 0.0
        %1465 = vmatpush1.msra.mxu0 0.0
        %1466 = vmatprep.subr.mxu0 0.0
        %1467 = vmatpush1.msra.mxu0 0.0
        %1468 = vmatprep.subr.mxu0 0.0
        %1469 = vmatpush1.msra.mxu0 0.0
        %1470 = vmatprep.subr.mxu0 0.0
        %1471 = vmatpush1.msra.mxu0 0.0
        %1472 = vmatprep.subr.mxu0 0.0
        %1473 = vmatpush1.msra.mxu0 0.0
        %1474 = vmatprep.subr.mxu0 0.0
        %1475 = vmatpush1.msra.mxu0 0.0
        %1476 = vmatprep.subr.mxu0 0.0
        %1477 = vmatpush1.msra.mxu0 0.0
        %1478 = vmatprep.subr.mxu0 0.0
        %1479 = vmatpush1.msra.mxu0 0.0
        %1480 = vmatprep.subr.mxu0 0.0
        %1481 = vmatpush1.msra.mxu0 0.0
        %1482 = vmatprep.subr.mxu0 0.0
        %1483 = vmatpush1.msra.mxu0 0.0
        %1484 = vmatprep.subr.mxu0 0.0
        %1485 = vmatpush1.msra.mxu0 0.0
        %1486 = vmatprep.subr.mxu0 0.0
        %1487 = vmatpush1.msra.mxu0 0.0
        %1488 = vmatprep.subr.mxu0 0.0
        %1489 = vmatpush1.msra.mxu0 0.0
        %1490 = vmatprep.mubr.f32.mxu0 0.0
        %1491 = vmatmul.mubr.f32.gmra.mrb[0].mxu0 %v1421
        %v1492 = vpop.f32.mrb[0].mxu0
        %v1493 = vadd.f32 0.0, %v1492
        %v1494 = vpop.f32.mrb[0].mxu0
        %1495 = vmatprep.mubr.f32.mxu0 0.0
        %1496 = vmatmul.mubr.f32.gmra.mrb[0].mxu0 %v1424
        %v1497 = vpop.f32.mrb[0].mxu0
        %v1498 = vadd.f32 0.0, %v1497
        %v1499 = vpop.f32.mrb[0].mxu0
        %1500 = vdwg.mxu0
        %v1501 = vadd.f32 %v1416, %v1493
        %v1502 = vadd.f32 %v1417, %v1498
        %v1503 = vld [vmem:[%s14] sm:$0xff]
        %v1504 = vld [vmem:[%s14 + $0x8] sm:$0x3]
        %1506 = vset.pattern.permute.xlu0 0
        %1507 = vperm.xlu0 %1506, %v1503
        %v1508 = vpop.permute.xlu0 %1507
        %1511 = vset.pattern.permute.xlu0 0
        %1512 = vperm.xlu0 %1511, %v1504
        %v1513 = vpop.permute.xlu0 %1512
        %v1515 = vadd.f32 %v1501, %v1508
        %v1516 = vadd.f32 %v1502, %v1513
        %v1517 = vld [vmem:[%s15] sm:$0x1f]
        %v1518 = vld [vmem:[%s16] sm:$0x1f]
        %v1520 = vsel %vm774, %v1518, 0
        %1522 = vmatprep.subr.mxu0 0.0
        %1523 = vmatpush1.msra.mxu0 %v780
        %1524 = vmatprep.subr.mxu0 0.0
        %1525 = vmatpush1.msra.mxu0 0.0
        %1526 = vmatprep.subr.mxu0 0.0
        %1527 = vmatpush1.msra.mxu0 0.0
        %1528 = vmatprep.subr.mxu0 0.0
        %1529 = vmatpush1.msra.mxu0 0.0
        %1530 = vmatprep.subr.mxu0 0.0
        %1531 = vmatpush1.msra.mxu0 0.0
        %1532 = vmatprep.subr.mxu0 0.0
        %1533 = vmatpush1.msra.mxu0 0.0
        %1534 = vmatprep.subr.mxu0 0.0
        %1535 = vmatpush1.msra.mxu0 0.0
        %1536 = vmatprep.subr.mxu0 0.0
        %1537 = vmatpush1.msra.mxu0 0.0
        %1538 = vmatprep.subr.mxu0 0.0
        %1539 = vmatpush1.msra.mxu0 0.0
        %1540 = vmatprep.subr.mxu0 0.0
        %1541 = vmatpush1.msra.mxu0 0.0
        %1542 = vmatprep.subr.mxu0 0.0
        %1543 = vmatpush1.msra.mxu0 0.0
        %1544 = vmatprep.subr.mxu0 0.0
        %1545 = vmatpush1.msra.mxu0 0.0
        %1546 = vmatprep.subr.mxu0 0.0
        %1547 = vmatpush1.msra.mxu0 0.0
        %1548 = vmatprep.subr.mxu0 0.0
        %1549 = vmatpush1.msra.mxu0 0.0
        %1550 = vmatprep.subr.mxu0 0.0
        %1551 = vmatpush1.msra.mxu0 0.0
        %1552 = vmatprep.subr.mxu0 0.0
        %1553 = vmatpush1.msra.mxu0 0.0
        %1554 = vmatprep.subr.mxu0 0.0
        %1555 = vmatpush1.msra.mxu0 0.0
        %1556 = vmatprep.subr.mxu0 0.0
        %1557 = vmatpush1.msra.mxu0 0.0
        %1558 = vmatprep.subr.mxu0 0.0
        %1559 = vmatpush1.msra.mxu0 0.0
        %1560 = vmatprep.subr.mxu0 0.0
        %1561 = vmatpush1.msra.mxu0 0.0
        %1562 = vmatprep.subr.mxu0 0.0
        %1563 = vmatpush1.msra.mxu0 0.0
        %1564 = vmatprep.subr.mxu0 0.0
        %1565 = vmatpush1.msra.mxu0 0.0
        %1566 = vmatprep.subr.mxu0 0.0
        %1567 = vmatpush1.msra.mxu0 0.0
        %1568 = vmatprep.subr.mxu0 0.0
        %1569 = vmatpush1.msra.mxu0 0.0
        %1570 = vmatprep.subr.mxu0 0.0
        %1571 = vmatpush1.msra.mxu0 0.0
        %1572 = vmatprep.subr.mxu0 0.0
        %1573 = vmatpush1.msra.mxu0 0.0
        %1574 = vmatprep.subr.mxu0 0.0
        %1575 = vmatpush1.msra.mxu0 0.0
        %1576 = vmatprep.subr.mxu0 0.0
        %1577 = vmatpush1.msra.mxu0 0.0
        %1578 = vmatprep.subr.mxu0 0.0
        %1579 = vmatpush1.msra.mxu0 0.0
        %1580 = vmatprep.subr.mxu0 0.0
        %1581 = vmatpush1.msra.mxu0 0.0
        %1582 = vmatprep.subr.mxu0 0.0
        %1583 = vmatpush1.msra.mxu0 0.0
        %1584 = vmatprep.subr.mxu0 0.0
        %1585 = vmatpush1.msra.mxu0 0.0
        %1586 = vmatprep.mubr.f32.mxu0 0.0
        %1587 = vmatmul.mubr.f32.gmra.mrb[0].mxu0 %v1520
        %v1588 = vpop.f32.mrb[0].mxu0
        %v1589 = vadd.f32 0.0, %v1588
        %v1590 = vpop.f32.mrb[0].mxu0
        %1591 = vdwg.mxu0
        %v1593 = vsel %vm698, %v1517, 0
        %1595 = vmatprep.subr.mxu0 0.0
        %1596 = vmatpush1.msra.mxu0 %v690
        %1597 = vmatprep.subr.mxu0 0.0
        %1598 = vmatpush1.msra.mxu0 0.0
        %1599 = vmatprep.subr.mxu0 0.0
        %1600 = vmatpush1.msra.mxu0 0.0
        %1601 = vmatprep.subr.mxu0 0.0
        %1602 = vmatpush1.msra.mxu0 0.0
        %1603 = vmatprep.subr.mxu0 0.0
        %1604 = vmatpush1.msra.mxu0 0.0
        %1605 = vmatprep.subr.mxu0 0.0
        %1606 = vmatpush1.msra.mxu0 0.0
        %1607 = vmatprep.subr.mxu0 0.0
        %1608 = vmatpush1.msra.mxu0 0.0
        %1609 = vmatprep.subr.mxu0 0.0
        %1610 = vmatpush1.msra.mxu0 0.0
        %1611 = vmatprep.subr.mxu0 0.0
        %1612 = vmatpush1.msra.mxu0 0.0
        %1613 = vmatprep.subr.mxu0 0.0
        %1614 = vmatpush1.msra.mxu0 0.0
        %1615 = vmatprep.subr.mxu0 0.0
        %1616 = vmatpush1.msra.mxu0 0.0
        %1617 = vmatprep.subr.mxu0 0.0
        %1618 = vmatpush1.msra.mxu0 0.0
        %1619 = vmatprep.subr.mxu0 0.0
        %1620 = vmatpush1.msra.mxu0 0.0
        %1621 = vmatprep.subr.mxu0 0.0
        %1622 = vmatpush1.msra.mxu0 0.0
        %1623 = vmatprep.subr.mxu0 0.0
        %1624 = vmatpush1.msra.mxu0 0.0
        %1625 = vmatprep.subr.mxu0 0.0
        %1626 = vmatpush1.msra.mxu0 0.0
        %1627 = vmatprep.subr.mxu0 0.0
        %1628 = vmatpush1.msra.mxu0 0.0
        %1629 = vmatprep.subr.mxu0 0.0
        %1630 = vmatpush1.msra.mxu0 0.0
        %1631 = vmatprep.subr.mxu0 0.0
        %1632 = vmatpush1.msra.mxu0 0.0
        %1633 = vmatprep.subr.mxu0 0.0
        %1634 = vmatpush1.msra.mxu0 0.0
        %1635 = vmatprep.subr.mxu0 0.0
        %1636 = vmatpush1.msra.mxu0 0.0
        %1637 = vmatprep.subr.mxu0 0.0
        %1638 = vmatpush1.msra.mxu0 0.0
        %1639 = vmatprep.subr.mxu0 0.0
        %1640 = vmatpush1.msra.mxu0 0.0
        %1641 = vmatprep.subr.mxu0 0.0
        %1642 = vmatpush1.msra.mxu0 0.0
        %1643 = vmatprep.subr.mxu0 0.0
        %1644 = vmatpush1.msra.mxu0 0.0
        %1645 = vmatprep.subr.mxu0 0.0
        %1646 = vmatpush1.msra.mxu0 0.0
        %1647 = vmatprep.subr.mxu0 0.0
        %1648 = vmatpush1.msra.mxu0 0.0
        %1649 = vmatprep.subr.mxu0 0.0
        %1650 = vmatpush1.msra.mxu0 0.0
        %1651 = vmatprep.subr.mxu0 0.0
        %1652 = vmatpush1.msra.mxu0 0.0
        %1653 = vmatprep.subr.mxu0 0.0
        %1654 = vmatpush1.msra.mxu0 0.0
        %1655 = vmatprep.subr.mxu0 0.0
        %1656 = vmatpush1.msra.mxu0 0.0
        %1657 = vmatprep.subr.mxu0 0.0
        %1658 = vmatpush1.msra.mxu0 0.0
        %1659 = vmatprep.mubr.f32.mxu0 0.0
        %1660 = vmatmul.mubr.f32.gmra.mrb[0].mxu0 %v1593
        %v1661 = vpop.f32.mrb[0].mxu0
        %v1662 = vadd.f32 %v1589, %v1661
        %v1663 = vpop.f32.mrb[0].mxu0
        %1664 = vdwg.mxu0
        %v1665 = vld [vmem:[%s17] sm:$0x1f]
        %v1667 = vsel %vm1081, %v1665, 0
        %1669 = vmatprep.subr.mxu0 0.0
        %1670 = vmatpush1.msra.mxu0 %v1087
        %1671 = vmatprep.subr.mxu0 0.0
        %1672 = vmatpush1.msra.mxu0 0.0
        %1673 = vmatprep.subr.mxu0 0.0
        %1674 = vmatpush1.msra.mxu0 0.0
        %1675 = vmatprep.subr.mxu0 0.0
        %1676 = vmatpush1.msra.mxu0 0.0
        %1677 = vmatprep.subr.mxu0 0.0
        %1678 = vmatpush1.msra.mxu0 0.0
        %1679 = vmatprep.subr.mxu0 0.0
        %1680 = vmatpush1.msra.mxu0 0.0
        %1681 = vmatprep.subr.mxu0 0.0
        %1682 = vmatpush1.msra.mxu0 0.0
        %1683 = vmatprep.subr.mxu0 0.0
        %1684 = vmatpush1.msra.mxu0 0.0
        %1685 = vmatprep.subr.mxu0 0.0
        %1686 = vmatpush1.msra.mxu0 0.0
        %1687 = vmatprep.subr.mxu0 0.0
        %1688 = vmatpush1.msra.mxu0 0.0
        %1689 = vmatprep.subr.mxu0 0.0
        %1690 = vmatpush1.msra.mxu0 0.0
        %1691 = vmatprep.subr.mxu0 0.0
        %1692 = vmatpush1.msra.mxu0 0.0
        %1693 = vmatprep.subr.mxu0 0.0
        %1694 = vmatpush1.msra.mxu0 0.0
        %1695 = vmatprep.subr.mxu0 0.0
        %1696 = vmatpush1.msra.mxu0 0.0
        %1697 = vmatprep.subr.mxu0 0.0
        %1698 = vmatpush1.msra.mxu0 0.0
        %1699 = vmatprep.subr.mxu0 0.0
        %1700 = vmatpush1.msra.mxu0 0.0
        %1701 = vmatprep.subr.mxu0 0.0
        %1702 = vmatpush1.msra.mxu0 0.0
        %1703 = vmatprep.subr.mxu0 0.0
        %1704 = vmatpush1.msra.mxu0 0.0
        %1705 = vmatprep.subr.mxu0 0.0
        %1706 = vmatpush1.msra.mxu0 0.0
        %1707 = vmatprep.subr.mxu0 0.0
        %1708 = vmatpush1.msra.mxu0 0.0
        %1709 = vmatprep.subr.mxu0 0.0
        %1710 = vmatpush1.msra.mxu0 0.0
        %1711 = vmatprep.subr.mxu0 0.0
        %1712 = vmatpush1.msra.mxu0 0.0
        %1713 = vmatprep.subr.mxu0 0.0
        %1714 = vmatpush1.msra.mxu0 0.0
        %1715 = vmatprep.subr.mxu0 0.0
        %1716 = vmatpush1.msra.mxu0 0.0
        %1717 = vmatprep.subr.mxu0 0.0
        %1718 = vmatpush1.msra.mxu0 0.0
        %1719 = vmatprep.subr.mxu0 0.0
        %1720 = vmatpush1.msra.mxu0 0.0
        %1721 = vmatprep.subr.mxu0 0.0
        %1722 = vmatpush1.msra.mxu0 0.0
        %1723 = vmatprep.subr.mxu0 0.0
        %1724 = vmatpush1.msra.mxu0 0.0
        %1725 = vmatprep.subr.mxu0 0.0
        %1726 = vmatpush1.msra.mxu0 0.0
        %1727 = vmatprep.subr.mxu0 0.0
        %1728 = vmatpush1.msra.mxu0 0.0
        %1729 = vmatprep.subr.mxu0 0.0
        %1730 = vmatpush1.msra.mxu0 0.0
        %1731 = vmatprep.subr.mxu0 0.0
        %1732 = vmatpush1.msra.mxu0 0.0
        %1733 = vmatprep.mubr.f32.mxu0 0.0
        %1734 = vmatmul.mubr.f32.gmra.mrb[0].mxu0 %v1667
        %v1735 = vpop.f32.mrb[0].mxu0
        %v1736 = vadd.f32 0.0, %v1735
        %v1737 = vpop.f32.mrb[0].mxu0
        %1738 = vdwg.mxu0
        %v1739 = vadd.f32 %v1662, %v1736
        %v1740 = vld [vmem:[%s18] sm:$0x1f]
        %v1742 = vsel %vm698, %v1740, 0
        %1744 = vmatprep.subr.mxu0 0.0
        %1745 = vmatpush1.msra.mxu0 %v1166
        %1746 = vmatprep.subr.mxu0 0.0
        %1747 = vmatpush1.msra.mxu0 0.0
        %1748 = vmatprep.subr.mxu0 0.0
        %1749 = vmatpush1.msra.mxu0 0.0
        %1750 = vmatprep.subr.mxu0 0.0
        %1751 = vmatpush1.msra.mxu0 0.0
        %1752 = vmatprep.subr.mxu0 0.0
        %1753 = vmatpush1.msra.mxu0 0.0
        %1754 = vmatprep.subr.mxu0 0.0
        %1755 = vmatpush1.msra.mxu0 0.0
        %1756 = vmatprep.subr.mxu0 0.0
        %1757 = vmatpush1.msra.mxu0 0.0
        %1758 = vmatprep.subr.mxu0 0.0
        %1759 = vmatpush1.msra.mxu0 0.0
        %1760 = vmatprep.subr.mxu0 0.0
        %1761 = vmatpush1.msra.mxu0 0.0
        %1762 = vmatprep.subr.mxu0 0.0
        %1763 = vmatpush1.msra.mxu0 0.0
        %1764 = vmatprep.subr.mxu0 0.0
        %1765 = vmatpush1.msra.mxu0 0.0
        %1766 = vmatprep.subr.mxu0 0.0
        %1767 = vmatpush1.msra.mxu0 0.0
        %1768 = vmatprep.subr.mxu0 0.0
        %1769 = vmatpush1.msra.mxu0 0.0
        %1770 = vmatprep.subr.mxu0 0.0
        %1771 = vmatpush1.msra.mxu0 0.0
        %1772 = vmatprep.subr.mxu0 0.0
        %1773 = vmatpush1.msra.mxu0 0.0
        %1774 = vmatprep.subr.mxu0 0.0
        %1775 = vmatpush1.msra.mxu0 0.0
        %1776 = vmatprep.subr.mxu0 0.0
        %1777 = vmatpush1.msra.mxu0 0.0
        %1778 = vmatprep.subr.mxu0 0.0
        %1779 = vmatpush1.msra.mxu0 0.0
        %1780 = vmatprep.subr.mxu0 0.0
        %1781 = vmatpush1.msra.mxu0 0.0
        %1782 = vmatprep.subr.mxu0 0.0
        %1783 = vmatpush1.msra.mxu0 0.0
        %1784 = vmatprep.subr.mxu0 0.0
        %1785 = vmatpush1.msra.mxu0 0.0
        %1786 = vmatprep.subr.mxu0 0.0
        %1787 = vmatpush1.msra.mxu0 0.0
        %1788 = vmatprep.subr.mxu0 0.0
        %1789 = vmatpush1.msra.mxu0 0.0
        %1790 = vmatprep.subr.mxu0 0.0
        %1791 = vmatpush1.msra.mxu0 0.0
        %1792 = vmatprep.subr.mxu0 0.0
        %1793 = vmatpush1.msra.mxu0 0.0
        %1794 = vmatprep.subr.mxu0 0.0
        %1795 = vmatpush1.msra.mxu0 0.0
        %1796 = vmatprep.subr.mxu0 0.0
        %1797 = vmatpush1.msra.mxu0 0.0
        %1798 = vmatprep.subr.mxu0 0.0
        %1799 = vmatpush1.msra.mxu0 0.0
        %1800 = vmatprep.subr.mxu0 0.0
        %1801 = vmatpush1.msra.mxu0 0.0
        %1802 = vmatprep.subr.mxu0 0.0
        %1803 = vmatpush1.msra.mxu0 0.0
        %1804 = vmatprep.subr.mxu0 0.0
        %1805 = vmatpush1.msra.mxu0 0.0
        %1806 = vmatprep.subr.mxu0 0.0
        %1807 = vmatpush1.msra.mxu0 0.0
        %1808 = vmatprep.mubr.f32.mxu0 0.0
        %1809 = vmatmul.mubr.f32.gmra.mrb[0].mxu0 %v1742
        %v1810 = vpop.f32.mrb[0].mxu0
        %v1811 = vadd.f32 0.0, %v1810
        %v1812 = vpop.f32.mrb[0].mxu0
        %1813 = vdwg.mxu0
        %v1814 = vadd.f32 %v1739, %v1811
        %v1815 = vld [vmem:[%s19] sm:$0x1f]
        %vm1816 = vcmask 80896
        %v1818 = vsel %vm1816, %v1815, 0
        %vm1820 = vcmask 1041408
        %v1822 = vsel %vm1820, %v1516, 0
        %1824 = vmatprep.subr.mxu0 0.0
        %1825 = vmatpush1.msra.mxu0 %v1515
        %1826 = vmatprep.subr.mxu0 0.0
        %1827 = vmatpush1.msra.mxu0 %v1822
        %1828 = vmatprep.subr.mxu0 0.0
        %1829 = vmatpush1.msra.mxu0 0.0
        %1830 = vmatprep.subr.mxu0 0.0
        %1831 = vmatpush1.msra.mxu0 0.0
        %1832 = vmatprep.subr.mxu0 0.0
        %1833 = vmatpush1.msra.mxu0 0.0
        %1834 = vmatprep.subr.mxu0 0.0
        %1835 = vmatpush1.msra.mxu0 0.0
        %1836 = vmatprep.subr.mxu0 0.0
        %1837 = vmatpush1.msra.mxu0 0.0
        %1838 = vmatprep.subr.mxu0 0.0
        %1839 = vmatpush1.msra.mxu0 0.0
        %1840 = vmatprep.subr.mxu0 0.0
        %1841 = vmatpush1.msra.mxu0 0.0
        %1842 = vmatprep.subr.mxu0 0.0
        %1843 = vmatpush1.msra.mxu0 0.0
        %1844 = vmatprep.subr.mxu0 0.0
        %1845 = vmatpush1.msra.mxu0 0.0
        %1846 = vmatprep.subr.mxu0 0.0
        %1847 = vmatpush1.msra.mxu0 0.0
        %1848 = vmatprep.subr.mxu0 0.0
        %1849 = vmatpush1.msra.mxu0 0.0
        %1850 = vmatprep.subr.mxu0 0.0
        %1851 = vmatpush1.msra.mxu0 0.0
        %1852 = vmatprep.subr.mxu0 0.0
        %1853 = vmatpush1.msra.mxu0 0.0
        %1854 = vmatprep.subr.mxu0 0.0
        %1855 = vmatpush1.msra.mxu0 0.0
        %1856 = vmatprep.subr.mxu0 0.0
        %1857 = vmatpush1.msra.mxu0 0.0
        %1858 = vmatprep.subr.mxu0 0.0
        %1859 = vmatpush1.msra.mxu0 0.0
        %1860 = vmatprep.subr.mxu0 0.0
        %1861 = vmatpush1.msra.mxu0 0.0
        %1862 = vmatprep.subr.mxu0 0.0
        %1863 = vmatpush1.msra.mxu0 0.0
        %1864 = vmatprep.subr.mxu0 0.0
        %1865 = vmatpush1.msra.mxu0 0.0
        %1866 = vmatprep.subr.mxu0 0.0
        %1867 = vmatpush1.msra.mxu0 0.0
        %1868 = vmatprep.subr.mxu0 0.0
        %1869 = vmatpush1.msra.mxu0 0.0
        %1870 = vmatprep.subr.mxu0 0.0
        %1871 = vmatpush1.msra.mxu0 0.0
        %1872 = vmatprep.subr.mxu0 0.0
        %1873 = vmatpush1.msra.mxu0 0.0
        %1874 = vmatprep.subr.mxu0 0.0
        %1875 = vmatpush1.msra.mxu0 0.0
        %1876 = vmatprep.subr.mxu0 0.0
        %1877 = vmatpush1.msra.mxu0 0.0
        %1878 = vmatprep.subr.mxu0 0.0
        %1879 = vmatpush1.msra.mxu0 0.0
        %1880 = vmatprep.subr.mxu0 0.0
        %1881 = vmatpush1.msra.mxu0 0.0
        %1882 = vmatprep.subr.mxu0 0.0
        %1883 = vmatpush1.msra.mxu0 0.0
        %1884 = vmatprep.subr.mxu0 0.0
        %1885 = vmatpush1.msra.mxu0 0.0
        %1886 = vmatprep.subr.mxu0 0.0
        %1887 = vmatpush1.msra.mxu0 0.0
        %1888 = vmatprep.mubr.f32.mxu0 0.0
        %1889 = vmatmul.mubr.f32.gmra.mrb[0].mxu0 %v1818
        %v1890 = vpop.f32.mrb[0].mxu0
        %v1891 = vadd.f32 0.0, %v1890
        %v1892 = vpop.f32.mrb[0].mxu0
        %1893 = vdwg.mxu0
        %v1894 = vadd.f32 %v1814, %v1891
        %v1895 = vld [vmem:[%s20] sm:$0x1f]
        %1897 = vset.pattern.permute.xlu0 0
        %1898 = vperm.xlu0 %1897, %v1895
        %v1899 = vpop.permute.xlu0 %1898
        %v1901 = vadd.f32 %v1894, %v1899
        %1902 = vst [vmem:[%s678] sm:$0xff] %v690
        %1903 = vst [vmem:[%s678 + $0x8] sm:$0xf] %v769
        %1904 = vst [vmem:[%s678 + $0xc] sm:$0x3f] %v931
        %1905 = vst [vmem:[%s685] sm:$0x1f] %v1901
        %s1906 = sand.u32 %s494, 1
        %s1907 = scalar_lea.sflag [#allocation3], %s1906
        %s1908 = sand.u32 %s494, 1
        %s1909 = smul.addr %s1908, 24
        %s1910 = scalar_lea.vmem [#allocation2], %s1909
        %s1911 = sand.u32 %s520, 1
        %s1912 = scalar_lea.sflag [#allocation5], %s1911
        %s1913 = sand.u32 %s520, 1
        %s1914 = smul.addr %s1913, 8
        %s1915 = scalar_lea.vmem [#allocation4], %s1914
        // Predicated region
        $region105: #{tpu_custom_call.1} parent=103 // pred_check
          %p1916 = pneg %p504
        $region106: #{tpu_custom_call.1} parent=103 // pred_check_branch
          %1918 = sbr.rel (%p1916) target = $region108
        $region107: #{tpu_custom_call.1} parent=103 // pred_region
          %s1920 = ssub.s32 384, 384
          %1921 = vsyncadd %s1907, %s1920
          %s1922 = smul.addr %s40, 128
          %s1923 = scalar_lea.hbm %s21, %s1922
          %s1924 = sshll.u32 %s1910, 4
          %s1925 = int_to_ptr.vmem [resolvable:$true] %s1924
          %1930 = dma.vmem_to_hbm [thread:$0]  %s1925, 384, %s1923, %s1907, 128, 384, 8
        $region108: #{tpu_custom_call.1} parent=103 // pred_fallthru
          _
        // Predicated region
        $region109: #{tpu_custom_call.1} parent=103 // pred_check
          %p1931 = pneg %p530
        $region110: #{tpu_custom_call.1} parent=103 // pred_check_branch
          %1933 = sbr.rel (%p1931) target = $region112
        $region111: #{tpu_custom_call.1} parent=103 // pred_region
          %s1935 = ssub.s32 128, 128
          %1936 = vsyncadd %s1912, %s1935
          %s1937 = smul.addr %s40, 128
          %s1938 = scalar_lea.hbm %s22, %s1937
          %s1940 = sshll.u32 %s1915, 4
          %s1941 = int_to_ptr.vmem [resolvable:$true] %s1940
          %1943 = dma.vmem_to_hbm [thread:$0]  %s1941, 128, %s1938, %s1912
        $region112: #{tpu_custom_call.1} parent=103 // pred_fallthru
          _
      $region104: #{tpu_custom_call.1} parent=5 // pred_fallthru
        _
      %p1944 = scmp.le.s32.totalorder 2, %s35
      // Predicated region
      $region113: #{tpu_custom_call.1} parent=5 // pred_check
        %p1945 = pneg %p1944
      $region114: #{tpu_custom_call.1} parent=5 // pred_check_branch
        %1947 = sbr.rel (%p1945) target = $region116
      $region115: #{tpu_custom_call.1} parent=5 // pred_region
        %s1948 = ssub.s32 %s35, 2
        // Predicated region
        $region117: #{tpu_custom_call.1} parent=115 // pred_check
          %p1949 = pneg %p510
        $region118: #{tpu_custom_call.1} parent=115 // pred_check_branch
          %1951 = sbr.rel (%p1949) target = $region120
        $region119: #{tpu_custom_call.1} parent=115 // pred_region
          %s1952 = sand.u32 %s495, 1
          %s1953 = scalar_lea.sflag [#allocation3], %s1952
          %s1954 = sand.u32 %s495, 1
          %s1955 = smul.addr %s1954, 24
          %s1956 = scalar_lea.vmem [#allocation2], %s1955
          %1957 = dma.done %s1953, 384
        $region120: #{tpu_custom_call.1} parent=115 // pred_fallthru
          _
        // Predicated region
        $region121: #{tpu_custom_call.1} parent=115 // pred_check
          %p1958 = pneg %p536
        $region122: #{tpu_custom_call.1} parent=115 // pred_check_branch
          %1960 = sbr.rel (%p1958) target = $region124
        $region123: #{tpu_custom_call.1} parent=115 // pred_region
          %s1961 = sand.u32 %s521, 1
          %s1962 = scalar_lea.sflag [#allocation5], %s1961
          %s1963 = sand.u32 %s521, 1
          %s1964 = smul.addr %s1963, 8
          %s1965 = scalar_lea.vmem [#allocation4], %s1964
          %1966 = dma.done %s1962, 128
        $region124: #{tpu_custom_call.1} parent=115 // pred_fallthru
          _
      $region116: #{tpu_custom_call.1} parent=5 // pred_fallthru
        _
    $region6: #{tpu_custom_call.1} parent=1 // loop_footer
      %s39 = sadd.s32 1, %s35
    $region7: #{tpu_custom_call.1} parent=1 // loop_footer_branch
      %34 = sbr.rel target = $region3
    $region8: #{tpu_custom_call.1} parent=1 // loop_exit
      _
    %1967 = vsyncpa [#allocation3], 1
    %s1968 = scalar_lea.sflag [#allocation3], 1
    %1969 = vsyncpa %s1968, 1
    %1970 = vsyncpa [#allocation5], 1
    %s1971 = scalar_lea.sflag [#allocation5], 1
    %1972 = vsyncpa %s1971, 1

</llo_original>
